<compile_context>
chip_gen: v5e
topology: v5e:2x2
jax: 0.10.0
libtpu: 0.0.40
codegen_flags: <defaults>
</compile_context>

<pallas_src>
import functools

import jax
import jax.numpy as jnp
from jax import lax
from jax.experimental import pallas as pl
from jax.experimental.pallas import tpu as pltpu


# ----------------------------- kernel helpers ------------------------------

def _layer_norm(x, w, b, eps=1e-5):
    # torch.nn.LayerNorm semantics (biased variance, eps inside sqrt); f32 math.
    mu = jnp.mean(x, axis=-1, keepdims=True)
    var = jnp.mean((x - mu) ** 2, axis=-1, keepdims=True)
    return (x - mu) * lax.rsqrt(var + eps) * w + b


def _gelu_exact(x):
    # torch.nn.GELU() default = exact erf formulation (kept exact for torch fidelity).
    return 0.5 * x * (1.0 + lax.erf(x * jnp.float32(0.7071067811865476)))


# ------------------------------- the kernel --------------------------------

def transformer_kernel(x_ref, ln1w_ref, ln1b_ref, wqkv_ref, wout_ref, bout_ref,
                       relb_ref, ln2w_ref, ln2b_ref, w1_ref, b1_ref, w2_ref,
                       b2_ref, o_ref, *, heads, dim_head):
    d = dim_head
    inner = heads * d

    # Single in-kernel (C, n) -> (n, C) transpose + f32 upcast, reused for LN1 and
    # both residual adds (no second upcast / transpose).
    x = jnp.transpose(x_ref[0]).astype(jnp.float32)            # (n, C) f32

    # ---- attention branch ---------------------------------------------------
    h = _layer_norm(x, ln1w_ref[...], ln1b_ref[...])            # f32 LN stats
    # One lane-dense QKV matmul: (n, C) x (C, 3*inner) -> (n, 3*inner), f32 acc.
    qkv = jnp.dot(h.astype(jnp.bfloat16), wqkv_ref[...],
                  preferred_element_type=jnp.float32)
    # Softmax scale is already baked into the q-columns of wqkv (see pack_params),
    # so q/k/v are plain 128-aligned, inner-wide slices.
    q = qkv[:, 0 * inner:1 * inner].astype(jnp.bfloat16)
    k = qkv[:, 1 * inner:2 * inner].astype(jnp.bfloat16)
    v = qkv[:, 2 * inner:3 * inner].astype(jnp.bfloat16)

    head_outs = []
    for hd in range(heads):                                     # static unroll
        sl = slice(hd * d, (hd + 1) * d)
        q_h, k_h, v_h = q[:, sl], k[:, sl], v[:, sl]            # (n, d) tiles
        # q . k^T without an explicit transpose: contract last dims on the MXU.
        dots = lax.dot_general(q_h, k_h, (((1,), (1,)), ((), ())),
                               preferred_element_type=jnp.float32)   # (n, n) f32
        dots = dots + relb_ref[hd].astype(jnp.float32)          # + relative bias
        m = jnp.max(dots, axis=-1, keepdims=True)               # f32 softmax
        e = jnp.exp(dots - m)
        s = jnp.sum(e, axis=-1, keepdims=True)
        p = (e * pl.reciprocal(s, approx=True)).astype(jnp.bfloat16)  # EUP recip
        head_outs.append(jnp.dot(p, v_h, preferred_element_type=jnp.float32))

    attn = jnp.concatenate(head_outs, axis=-1)                  # (n, inner) f32
    # Single output projection with a 256-wide contraction: (n, inner) x (inner, C).
    attn = jnp.dot(attn.astype(jnp.bfloat16), wout_ref[...],
                   preferred_element_type=jnp.float32)
    x1 = x + attn + bout_ref[...]                               # residual 1

    # ---- feed-forward branch ------------------------------------------------
    h2 = _layer_norm(x1, ln2w_ref[...], ln2b_ref[...])
    f = jnp.dot(h2.astype(jnp.bfloat16), w1_ref[...],
                preferred_element_type=jnp.float32) + b1_ref[...]
    f = _gelu_exact(f)
    f = jnp.dot(f.astype(jnp.bfloat16), w2_ref[...],
                preferred_element_type=jnp.float32) + b2_ref[...]

    # residual 2 + store back in the consumer's NCHW layout (C, n).
    o_ref[0] = jnp.transpose(x1 + f).astype(o_ref.dtype)


# ------------------------------ wrapper / glue ------------------------------

def make_relative_bias(table, ih, iw):
    """Reproduce the gather of relative_bias_table -> (heads, N, N)."""
    ch, cw = jnp.meshgrid(jnp.arange(ih), jnp.arange(iw), indexing="ij")
    coords = jnp.stack([ch, cw]).reshape(2, -1)                 # (2, N)
    rel = coords[:, :, None] - coords[:, None, :]               # (2, N, N)
    rel = rel.at[0].add(ih - 1)
    rel = rel.at[1].add(iw - 1)
    rel = rel.at[0].multiply(2 * iw - 1)
    rel_index = rel.transpose(1, 2, 0).sum(-1).reshape(-1)      # (N*N,)
    n = ih * iw
    bias = table[rel_index]                                     # (N*N, heads)
    return bias.reshape(n, n, bias.shape[-1]).transpose(2, 0, 1)  # (heads, N, N)


def pack_params(params, image_size, heads=8, dim_head=32):
    """One-time parameter packing (scale fold, bf16 casts, bias gather).

    Hoisted OUT of the per-call path: call once, reuse across forwards.
    """
    ih, iw = image_size
    inner = heads * dim_head
    scale = jnp.float32(dim_head ** (-0.5))
    w_qkv = params["w_qkv"]                                     # (C, 3*inner), (in,out)
    # Fold the softmax scale into the q columns so the kernel never scales dots.
    w_qkv = jnp.concatenate([w_qkv[:, :inner] * scale, w_qkv[:, inner:]], axis=1)
    return {
        "ln1_w": params["ln1_w"].astype(jnp.float32),
        "ln1_b": params["ln1_b"].astype(jnp.float32),
        "w_qkv": w_qkv.astype(jnp.bfloat16),                    # (C, 3*inner)
        "w_out": params["w_out"].astype(jnp.bfloat16),          # (inner, C)
        "b_out": params["b_out"].astype(jnp.float32),           # (1, C)
        "relb": make_relative_bias(params["rel_table"], ih, iw).astype(jnp.bfloat16),
        "ln2_w": params["ln2_w"].astype(jnp.float32),
        "ln2_b": params["ln2_b"].astype(jnp.float32),
        "w1": params["w1"].astype(jnp.bfloat16),                # (C, hidden)
        "b1": params["b1"].astype(jnp.float32),                 # (1, hidden)
        "w2": params["w2"].astype(jnp.bfloat16),                # (hidden, C)
        "b2": params["b2"].astype(jnp.float32),                 # (1, C)
    }


def transformer_forward(x_nchw, packed, image_size, heads=8, dim_head=32):
    B, C, H, W = x_nchw.shape
    ih, iw = image_size
    assert (H, W) == (ih, iw)
    n = H * W
    inner = heads * dim_head
    hidden = packed["w1"].shape[1]

    # NCHW stays put: (B, C, H, W) -> (B, C, n) is a free reshape; the small
    # (C, n) <-> (n, C) transpose happens in-kernel instead of as HBM passes.
    x_cn = x_nchw.reshape(B, C, n).astype(jnp.float32)

    kernel = functools.partial(transformer_kernel, heads=heads, dim_head=dim_head)

    def const_spec(shape):
        zeros = (0,) * len(shape)
        return pl.BlockSpec(shape, lambda b, _z=zeros: _z)

    out_cn = pl.pallas_call(
        kernel,
        out_shape=jax.ShapeDtypeStruct((B, C, n), jnp.float32),
        grid_spec=pltpu.PrefetchScalarGridSpec(
            num_scalar_prefetch=0,
            grid=(B,),                                          # one step per batch element
            in_specs=[
                pl.BlockSpec((1, C, n), lambda b: (b, 0, 0)),   # x, native NCHW slab
                const_spec((1, C)),                             # ln1 weight
                const_spec((1, C)),                             # ln1 bias
                const_spec((C, 3 * inner)),                     # qkv weights (scale folded)
                const_spec((inner, C)),                         # out projection weights
                const_spec((1, C)),                             # out projection bias
                const_spec((heads, n, n)),                      # relative bias (bf16)
                const_spec((1, C)),                             # ln2 weight
                const_spec((1, C)),                             # ln2 bias
                const_spec((C, hidden)),                        # ff linear1
                const_spec((1, hidden)),                        # ff bias1
                const_spec((hidden, C)),                        # ff linear2
                const_spec((1, C)),                             # ff bias2
            ],
            out_specs=pl.BlockSpec((1, C, n), lambda b: (b, 0, 0)),
        ),
        compiler_params=pltpu.CompilerParams(
            dimension_semantics=("parallel",),                  # batch feeds both v7x TCs
            vmem_limit_bytes=32 * 1024 * 1024,
        ),
    )(x_cn,
      packed["ln1_w"], packed["ln1_b"],
      packed["w_qkv"], packed["w_out"], packed["b_out"],
      packed["relb"],
      packed["ln2_w"], packed["ln2_b"],
      packed["w1"], packed["b1"], packed["w2"], packed["b2"])

    return out_cn.reshape(B, C, H, W)


# --------------------------- pure-JAX reference (f32) -----------------------

def transformer_reference(x_nchw, params, image_size, heads=8, dim_head=32):
    B, C, H, W = x_nchw.shape
    n = H * W
    inner = heads * dim_head
    scale = dim_head ** (-0.5)
    x = jnp.transpose(x_nchw.reshape(B, C, n), (0, 2, 1))       # (B, n, C)
    relb = make_relative_bias(params["rel_table"], *image_size)

    def ln(t, w, b, eps=1e-5):
        mu = t.mean(-1, keepdims=True)
        var = ((t - mu) ** 2).mean(-1, keepdims=True)
        return (t - mu) / jnp.sqrt(var + eps) * w + b

    h = ln(x, params["ln1_w"], params["ln1_b"])
    qkv = h @ params["w_qkv"]
    q, k, v = jnp.split(qkv, 3, axis=-1)
    sh = lambda t: t.reshape(B, n, heads, dim_head).transpose(0, 2, 1, 3)
    q, k, v = sh(q), sh(k), sh(v)
    dots = jnp.einsum("bhnd,bhmd->bhnm", q, k) * scale + relb[None]
    attn = jax.nn.softmax(dots, axis=-1)
    out = jnp.einsum("bhnm,bhmd->bhnd", attn, v)
    out = out.transpose(0, 2, 1, 3).reshape(B, n, inner)
    x1 = x + out @ params["w_out"] + params["b_out"]
    h2 = ln(x1, params["ln2_w"], params["ln2_b"])
    f = h2 @ params["w1"] + params["b1"]
    f = 0.5 * f * (1.0 + lax.erf(f / jnp.sqrt(2.0)))
    f = f @ params["w2"] + params["b2"]
    y = x1 + f
    return jnp.transpose(y, (0, 2, 1)).reshape(B, C, H, W)


# --------------------------------- main -------------------------------------

if __name__ == "__main__":
    # Small shapes consistent with the module: downsample=False requires inp == oup.
    B, inp, ih, iw = 2, 32, 4, 4
    heads, dim_head = 8, 32          # module defaults
    inner = heads * dim_head         # 256
    hidden = inp * 4                 # 128
    n = ih * iw

    key = jax.random.PRNGKey(0)
    keys = jax.random.split(key, 10)
    s = 0.05
    params = {
        "ln1_w": jnp.ones((1, inp), jnp.float32),
        "ln1_b": jnp.zeros((1, inp), jnp.float32),
        # weights stored pre-transposed as (in, out) so the kernel does x @ W
        "w_qkv": s * jax.random.normal(keys[0], (inp, 3 * inner), jnp.float32),
        "w_out": s * jax.random.normal(keys[1], (inner, inp), jnp.float32),
        "b_out": s * jax.random.normal(keys[2], (1, inp), jnp.float32),
        # relative_bias_table is zeros in torch __init__; use small randoms to
        # exercise the bias path (deterministic from PRNGKey(0)).
        "rel_table": s * jax.random.normal(keys[3], ((2 * ih - 1) * (2 * iw - 1), heads),
                                           jnp.float32),
        "ln2_w": jnp.ones((1, inp), jnp.float32),
        "ln2_b": jnp.zeros((1, inp), jnp.float32),
        "w1": s * jax.random.normal(keys[4], (inp, hidden), jnp.float32),
        "b1": s * jax.random.normal(keys[5], (1, hidden), jnp.float32),
        "w2": s * jax.random.normal(keys[6], (hidden, inp), jnp.float32),
        "b2": s * jax.random.normal(keys[7], (1, inp), jnp.float32),
    }

    x = jax.random.normal(keys[8], (B, inp, ih, iw), jnp.float32)  # NCHW like PyTorch

    # One-time parameter packing (outside the per-call path), then a jitted forward.
    packed = jax.tree_util.tree_map(
        jax.block_until_ready, pack_params(params, (ih, iw), heads, dim_head))
    fwd = jax.jit(functools.partial(transformer_forward, image_size=(ih, iw),
                                    heads=heads, dim_head=dim_head))

    out = jax.block_until_ready(fwd(x, packed))
    assert out.shape == (B, inp, ih, iw)
    assert bool(jnp.all(jnp.isfinite(out)))

    # Loose tolerance: kernel uses bf16 MXU inputs / bf16 bias (f32 accumulate)
    # plus an approximate softmax reciprocal.
    ref = transformer_reference(x, params, image_size=(ih, iw),
                                heads=heads, dim_head=dim_head)
    max_err = float(jnp.max(jnp.abs(out - ref)))
    assert max_err < 5e-2, f"max abs error vs f32 reference: {max_err}"

    print("KERNEL_OK")
</pallas_src>

<mosaic_0001>
module attributes {stable_mosaic.version = 11 : i64} {
  func.func @transformer_kernel(%arg0: i32, %arg1: memref<1x32x16xf32, #tpu.memory_space<vmem>>, %arg2: memref<1x32xf32, #tpu.memory_space<vmem>>, %arg3: memref<1x32xf32, #tpu.memory_space<vmem>>, %arg4: memref<32x768xbf16, #tpu.memory_space<vmem>>, %arg5: memref<256x32xbf16, #tpu.memory_space<vmem>>, %arg6: memref<1x32xf32, #tpu.memory_space<vmem>>, %arg7: memref<8x16x16xbf16, #tpu.memory_space<vmem>>, %arg8: memref<1x32xf32, #tpu.memory_space<vmem>>, %arg9: memref<1x32xf32, #tpu.memory_space<vmem>>, %arg10: memref<32x128xbf16, #tpu.memory_space<vmem>>, %arg11: memref<1x128xf32, #tpu.memory_space<vmem>>, %arg12: memref<128x32xbf16, #tpu.memory_space<vmem>>, %arg13: memref<1x32xf32, #tpu.memory_space<vmem>>, %arg14: memref<1x32x16xf32, #tpu.memory_space<vmem>>) attributes {dimension_semantics = [#tpu.dimension_semantics<parallel>], iteration_bounds = array<i64: 2>, scalar_prefetch = 0 : i64, scratch_operands = 0 : i64, tpu.core_type = #tpu.core_type<tc>, window_params = [{transform_indices = @transform_0, window_bounds = array<i64: 1, 32, 16>}, {pipeline_mode = #tpu.pipeline_mode<synchronous>, transform_indices = @transform_1, window_bounds = array<i64: 1, 32>}, {pipeline_mode = #tpu.pipeline_mode<synchronous>, transform_indices = @transform_2, window_bounds = array<i64: 1, 32>}, {pipeline_mode = #tpu.pipeline_mode<synchronous>, transform_indices = @transform_3, window_bounds = array<i64: 32, 768>}, {pipeline_mode = #tpu.pipeline_mode<synchronous>, transform_indices = @transform_4, window_bounds = array<i64: 256, 32>}, {pipeline_mode = #tpu.pipeline_mode<synchronous>, transform_indices = @transform_5, window_bounds = array<i64: 1, 32>}, {pipeline_mode = #tpu.pipeline_mode<synchronous>, transform_indices = @transform_6, window_bounds = array<i64: 8, 16, 16>}, {pipeline_mode = #tpu.pipeline_mode<synchronous>, transform_indices = @transform_7, window_bounds = array<i64: 1, 32>}, {pipeline_mode = #tpu.pipeline_mode<synchronous>, transform_indices = @transform_8, window_bounds = array<i64: 1, 32>}, {pipeline_mode = #tpu.pipeline_mode<synchronous>, transform_indices = @transform_9, window_bounds = array<i64: 32, 128>}, {pipeline_mode = #tpu.pipeline_mode<synchronous>, transform_indices = @transform_10, window_bounds = array<i64: 1, 128>}, {pipeline_mode = #tpu.pipeline_mode<synchronous>, transform_indices = @transform_11, window_bounds = array<i64: 128, 32>}, {pipeline_mode = #tpu.pipeline_mode<synchronous>, transform_indices = @transform_12, window_bounds = array<i64: 1, 32>}, {transform_indices = @transform_13, window_bounds = array<i64: 1, 32, 16>}]} {
    %c0 = arith.constant 0 : index
    %c0_0 = arith.constant 0 : index
    %c0_1 = arith.constant 0 : index
    %0 = vector.load %arg1[%c0, %c0_0, %c0_1] : memref<1x32x16xf32, #tpu.memory_space<vmem>>, vector<1x32x16xf32>
    %1 = vector.shape_cast %0 : vector<1x32x16xf32> to vector<32x16xf32>
    %2 = tpu.transpose %1, [1, 0] : vector<32x16xf32> -> vector<16x32xf32>
    %c0_2 = arith.constant 0 : index
    %c0_3 = arith.constant 0 : index
    %3 = vector.load %arg2[%c0_2, %c0_3] : memref<1x32xf32, #tpu.memory_space<vmem>>, vector<1x32xf32>
    %c0_4 = arith.constant 0 : index
    %c0_5 = arith.constant 0 : index
    %4 = vector.load %arg3[%c0_4, %c0_5] : memref<1x32xf32, #tpu.memory_space<vmem>>, vector<1x32xf32>
    %cst = arith.constant dense<0.000000e+00> : vector<16xf32>
    %5 = vector.multi_reduction <add>, %2, %cst [1] : vector<16x32xf32> to vector<16xf32>
    %6 = vector.shape_cast %5 : vector<16xf32> to vector<16x1xf32>
    %cst_6 = arith.constant 3.200000e+01 : f32
    %7 = vector.broadcast %cst_6 : f32 to vector<16x1xf32>
    %8 = arith.divf %6, %7 : vector<16x1xf32>
    %9 = vector.broadcast %8 : vector<16x1xf32> to vector<16x32xf32>
    %10 = arith.subf %2, %9 : vector<16x32xf32>
    %11 = arith.mulf %10, %10 : vector<16x32xf32>
    %cst_7 = arith.constant dense<0.000000e+00> : vector<16xf32>
    %12 = vector.multi_reduction <add>, %11, %cst_7 [1] : vector<16x32xf32> to vector<16xf32>
    %13 = vector.shape_cast %12 : vector<16xf32> to vector<16x1xf32>
    %cst_8 = arith.constant 3.200000e+01 : f32
    %14 = vector.broadcast %cst_8 : f32 to vector<16x1xf32>
    %15 = arith.divf %13, %14 : vector<16x1xf32>
    %16 = vector.broadcast %8 : vector<16x1xf32> to vector<16x32xf32>
    %17 = arith.subf %2, %16 : vector<16x32xf32>
    %cst_9 = arith.constant 9.99999974E-6 : f32
    %18 = vector.broadcast %cst_9 : f32 to vector<16x1xf32>
    %19 = arith.addf %15, %18 : vector<16x1xf32>
    %20 = math.rsqrt %19 : vector<16x1xf32>
    %21 = vector.broadcast %20 : vector<16x1xf32> to vector<16x32xf32>
    %22 = arith.mulf %17, %21 : vector<16x32xf32>
    %23 = vector.broadcast %3 : vector<1x32xf32> to vector<16x32xf32>
    %24 = arith.mulf %22, %23 : vector<16x32xf32>
    %25 = vector.broadcast %4 : vector<1x32xf32> to vector<16x32xf32>
    %26 = arith.addf %24, %25 : vector<16x32xf32>
    %27 = arith.truncf %26 : vector<16x32xf32> to vector<16x32xbf16>
    %c0_10 = arith.constant 0 : index
    %c0_11 = arith.constant 0 : index
    %28 = vector.load %arg4[%c0_10, %c0_11] : memref<32x768xbf16, #tpu.memory_space<vmem>>, vector<32x768xbf16>
    %cst_12 = arith.constant dense<0.000000e+00> : vector<16x768xf32>
    %29 = tpu.matmul %27, %28, %cst_12 {dimension_numbers = #tpu.dot_dimension_numbers<[1], [0], [0], [1], [0, 0, 1, 1], [], []>} : vector<16x32xbf16>, vector<32x768xbf16>, vector<16x768xf32> -> vector<16x768xf32>
    %30 = vector.extract_strided_slice %29 {offsets = [0, 0], sizes = [16, 256], strides = [1, 1]} : vector<16x768xf32> to vector<16x256xf32>
    %31 = arith.truncf %30 : vector<16x256xf32> to vector<16x256xbf16>
    %32 = vector.extract_strided_slice %29 {offsets = [0, 256], sizes = [16, 256], strides = [1, 1]} : vector<16x768xf32> to vector<16x256xf32>
    %33 = arith.truncf %32 : vector<16x256xf32> to vector<16x256xbf16>
    %34 = vector.extract_strided_slice %29 {offsets = [0, 512], sizes = [16, 256], strides = [1, 1]} : vector<16x768xf32> to vector<16x256xf32>
    %35 = arith.truncf %34 : vector<16x256xf32> to vector<16x256xbf16>
    %36 = vector.extract_strided_slice %31 {offsets = [0, 0], sizes = [16, 32], strides = [1, 1]} : vector<16x256xbf16> to vector<16x32xbf16>
    %37 = vector.extract_strided_slice %33 {offsets = [0, 0], sizes = [16, 32], strides = [1, 1]} : vector<16x256xbf16> to vector<16x32xbf16>
    %38 = vector.extract_strided_slice %35 {offsets = [0, 0], sizes = [16, 32], strides = [1, 1]} : vector<16x256xbf16> to vector<16x32xbf16>
    %cst_13 = arith.constant dense<0.000000e+00> : vector<16x16xf32>
    %39 = tpu.matmul %36, %37, %cst_13 {dimension_numbers = #tpu.dot_dimension_numbers<[1], [1], [0], [0], [0, 0, 1, 0], [], []>} : vector<16x32xbf16>, vector<16x32xbf16>, vector<16x16xf32> -> vector<16x16xf32>
    %c0_14 = arith.constant 0 : index
    %c0_15 = arith.constant 0 : index
    %c0_16 = arith.constant 0 : index
    %40 = vector.load %arg7[%c0_14, %c0_15, %c0_16] : memref<8x16x16xbf16, #tpu.memory_space<vmem>>, vector<1x16x16xbf16>
    %41 = vector.shape_cast %40 : vector<1x16x16xbf16> to vector<16x16xbf16>
    %42 = arith.extf %41 : vector<16x16xbf16> to vector<16x16xf32>
    %43 = arith.addf %39, %42 : vector<16x16xf32>
    %cst_17 = arith.constant dense<0xFF800000> : vector<16xf32>
    %44 = vector.multi_reduction <maximumf>, %43, %cst_17 [1] : vector<16x16xf32> to vector<16xf32>
    %45 = vector.shape_cast %44 : vector<16xf32> to vector<16x1xf32>
    %46 = vector.broadcast %45 : vector<16x1xf32> to vector<16x16xf32>
    %47 = arith.subf %43, %46 : vector<16x16xf32>
    %48 = math.exp %47 : vector<16x16xf32>
    %cst_18 = arith.constant dense<0.000000e+00> : vector<16xf32>
    %49 = vector.multi_reduction <add>, %48, %cst_18 [1] : vector<16x16xf32> to vector<16xf32>
    %50 = vector.shape_cast %49 : vector<16xf32> to vector<16x1xf32>
    %51 = tpu.reciprocal %50 {approx = true} : vector<16x1xf32> -> vector<16x1xf32>
    %52 = vector.broadcast %51 : vector<16x1xf32> to vector<16x16xf32>
    %53 = arith.mulf %48, %52 : vector<16x16xf32>
    %54 = arith.truncf %53 : vector<16x16xf32> to vector<16x16xbf16>
    %cst_19 = arith.constant dense<0.000000e+00> : vector<16x32xf32>
    %55 = tpu.matmul %54, %38, %cst_19 {dimension_numbers = #tpu.dot_dimension_numbers<[1], [0], [0], [1], [0, 0, 1, 1], [], []>} : vector<16x16xbf16>, vector<16x32xbf16>, vector<16x32xf32> -> vector<16x32xf32>
    %56 = vector.extract_strided_slice %31 {offsets = [0, 32], sizes = [16, 32], strides = [1, 1]} : vector<16x256xbf16> to vector<16x32xbf16>
    %57 = vector.extract_strided_slice %33 {offsets = [0, 32], sizes = [16, 32], strides = [1, 1]} : vector<16x256xbf16> to vector<16x32xbf16>
    %58 = vector.extract_strided_slice %35 {offsets = [0, 32], sizes = [16, 32], strides = [1, 1]} : vector<16x256xbf16> to vector<16x32xbf16>
    %cst_20 = arith.constant dense<0.000000e+00> : vector<16x16xf32>
    %59 = tpu.matmul %56, %57, %cst_20 {dimension_numbers = #tpu.dot_dimension_numbers<[1], [1], [0], [0], [0, 0, 1, 0], [], []>} : vector<16x32xbf16>, vector<16x32xbf16>, vector<16x16xf32> -> vector<16x16xf32>
    %c1 = arith.constant 1 : index
    %c0_21 = arith.constant 0 : index
    %c0_22 = arith.constant 0 : index
    %60 = vector.load %arg7[%c1, %c0_21, %c0_22] : memref<8x16x16xbf16, #tpu.memory_space<vmem>>, vector<1x16x16xbf16>
    %61 = vector.shape_cast %60 : vector<1x16x16xbf16> to vector<16x16xbf16>
    %62 = arith.extf %61 : vector<16x16xbf16> to vector<16x16xf32>
    %63 = arith.addf %59, %62 : vector<16x16xf32>
    %cst_23 = arith.constant dense<0xFF800000> : vector<16xf32>
    %64 = vector.multi_reduction <maximumf>, %63, %cst_23 [1] : vector<16x16xf32> to vector<16xf32>
    %65 = vector.shape_cast %64 : vector<16xf32> to vector<16x1xf32>
    %66 = vector.broadcast %65 : vector<16x1xf32> to vector<16x16xf32>
    %67 = arith.subf %63, %66 : vector<16x16xf32>
    %68 = math.exp %67 : vector<16x16xf32>
    %cst_24 = arith.constant dense<0.000000e+00> : vector<16xf32>
    %69 = vector.multi_reduction <add>, %68, %cst_24 [1] : vector<16x16xf32> to vector<16xf32>
    %70 = vector.shape_cast %69 : vector<16xf32> to vector<16x1xf32>
    %71 = tpu.reciprocal %70 {approx = true} : vector<16x1xf32> -> vector<16x1xf32>
    %72 = vector.broadcast %71 : vector<16x1xf32> to vector<16x16xf32>
    %73 = arith.mulf %68, %72 : vector<16x16xf32>
    %74 = arith.truncf %73 : vector<16x16xf32> to vector<16x16xbf16>
    %cst_25 = arith.constant dense<0.000000e+00> : vector<16x32xf32>
    %75 = tpu.matmul %74, %58, %cst_25 {dimension_numbers = #tpu.dot_dimension_numbers<[1], [0], [0], [1], [0, 0, 1, 1], [], []>} : vector<16x16xbf16>, vector<16x32xbf16>, vector<16x32xf32> -> vector<16x32xf32>
    %76 = vector.extract_strided_slice %31 {offsets = [0, 64], sizes = [16, 32], strides = [1, 1]} : vector<16x256xbf16> to vector<16x32xbf16>
    %77 = vector.extract_strided_slice %33 {offsets = [0, 64], sizes = [16, 32], strides = [1, 1]} : vector<16x256xbf16> to vector<16x32xbf16>
    %78 = vector.extract_strided_slice %35 {offsets = [0, 64], sizes = [16, 32], strides = [1, 1]} : vector<16x256xbf16> to vector<16x32xbf16>
    %cst_26 = arith.constant dense<0.000000e+00> : vector<16x16xf32>
    %79 = tpu.matmul %76, %77, %cst_26 {dimension_numbers = #tpu.dot_dimension_numbers<[1], [1], [0], [0], [0, 0, 1, 0], [], []>} : vector<16x32xbf16>, vector<16x32xbf16>, vector<16x16xf32> -> vector<16x16xf32>
    %c2 = arith.constant 2 : index
    %c0_27 = arith.constant 0 : index
    %c0_28 = arith.constant 0 : index
    %80 = vector.load %arg7[%c2, %c0_27, %c0_28] : memref<8x16x16xbf16, #tpu.memory_space<vmem>>, vector<1x16x16xbf16>
    %81 = vector.shape_cast %80 : vector<1x16x16xbf16> to vector<16x16xbf16>
    %82 = arith.extf %81 : vector<16x16xbf16> to vector<16x16xf32>
    %83 = arith.addf %79, %82 : vector<16x16xf32>
    %cst_29 = arith.constant dense<0xFF800000> : vector<16xf32>
    %84 = vector.multi_reduction <maximumf>, %83, %cst_29 [1] : vector<16x16xf32> to vector<16xf32>
    %85 = vector.shape_cast %84 : vector<16xf32> to vector<16x1xf32>
    %86 = vector.broadcast %85 : vector<16x1xf32> to vector<16x16xf32>
    %87 = arith.subf %83, %86 : vector<16x16xf32>
    %88 = math.exp %87 : vector<16x16xf32>
    %cst_30 = arith.constant dense<0.000000e+00> : vector<16xf32>
    %89 = vector.multi_reduction <add>, %88, %cst_30 [1] : vector<16x16xf32> to vector<16xf32>
    %90 = vector.shape_cast %89 : vector<16xf32> to vector<16x1xf32>
    %91 = tpu.reciprocal %90 {approx = true} : vector<16x1xf32> -> vector<16x1xf32>
    %92 = vector.broadcast %91 : vector<16x1xf32> to vector<16x16xf32>
    %93 = arith.mulf %88, %92 : vector<16x16xf32>
    %94 = arith.truncf %93 : vector<16x16xf32> to vector<16x16xbf16>
    %cst_31 = arith.constant dense<0.000000e+00> : vector<16x32xf32>
    %95 = tpu.matmul %94, %78, %cst_31 {dimension_numbers = #tpu.dot_dimension_numbers<[1], [0], [0], [1], [0, 0, 1, 1], [], []>} : vector<16x16xbf16>, vector<16x32xbf16>, vector<16x32xf32> -> vector<16x32xf32>
    %96 = vector.extract_strided_slice %31 {offsets = [0, 96], sizes = [16, 32], strides = [1, 1]} : vector<16x256xbf16> to vector<16x32xbf16>
    %97 = vector.extract_strided_slice %33 {offsets = [0, 96], sizes = [16, 32], strides = [1, 1]} : vector<16x256xbf16> to vector<16x32xbf16>
    %98 = vector.extract_strided_slice %35 {offsets = [0, 96], sizes = [16, 32], strides = [1, 1]} : vector<16x256xbf16> to vector<16x32xbf16>
    %cst_32 = arith.constant dense<0.000000e+00> : vector<16x16xf32>
    %99 = tpu.matmul %96, %97, %cst_32 {dimension_numbers = #tpu.dot_dimension_numbers<[1], [1], [0], [0], [0, 0, 1, 0], [], []>} : vector<16x32xbf16>, vector<16x32xbf16>, vector<16x16xf32> -> vector<16x16xf32>
    %c3 = arith.constant 3 : index
    %c0_33 = arith.constant 0 : index
    %c0_34 = arith.constant 0 : index
    %100 = vector.load %arg7[%c3, %c0_33, %c0_34] : memref<8x16x16xbf16, #tpu.memory_space<vmem>>, vector<1x16x16xbf16>
    %101 = vector.shape_cast %100 : vector<1x16x16xbf16> to vector<16x16xbf16>
    %102 = arith.extf %101 : vector<16x16xbf16> to vector<16x16xf32>
    %103 = arith.addf %99, %102 : vector<16x16xf32>
    %cst_35 = arith.constant dense<0xFF800000> : vector<16xf32>
    %104 = vector.multi_reduction <maximumf>, %103, %cst_35 [1] : vector<16x16xf32> to vector<16xf32>
    %105 = vector.shape_cast %104 : vector<16xf32> to vector<16x1xf32>
    %106 = vector.broadcast %105 : vector<16x1xf32> to vector<16x16xf32>
    %107 = arith.subf %103, %106 : vector<16x16xf32>
    %108 = math.exp %107 : vector<16x16xf32>
    %cst_36 = arith.constant dense<0.000000e+00> : vector<16xf32>
    %109 = vector.multi_reduction <add>, %108, %cst_36 [1] : vector<16x16xf32> to vector<16xf32>
    %110 = vector.shape_cast %109 : vector<16xf32> to vector<16x1xf32>
    %111 = tpu.reciprocal %110 {approx = true} : vector<16x1xf32> -> vector<16x1xf32>
    %112 = vector.broadcast %111 : vector<16x1xf32> to vector<16x16xf32>
    %113 = arith.mulf %108, %112 : vector<16x16xf32>
    %114 = arith.truncf %113 : vector<16x16xf32> to vector<16x16xbf16>
    %cst_37 = arith.constant dense<0.000000e+00> : vector<16x32xf32>
    %115 = tpu.matmul %114, %98, %cst_37 {dimension_numbers = #tpu.dot_dimension_numbers<[1], [0], [0], [1], [0, 0, 1, 1], [], []>} : vector<16x16xbf16>, vector<16x32xbf16>, vector<16x32xf32> -> vector<16x32xf32>
    %116 = vector.extract_strided_slice %31 {offsets = [0, 128], sizes = [16, 32], strides = [1, 1]} : vector<16x256xbf16> to vector<16x32xbf16>
    %117 = vector.extract_strided_slice %33 {offsets = [0, 128], sizes = [16, 32], strides = [1, 1]} : vector<16x256xbf16> to vector<16x32xbf16>
    %118 = vector.extract_strided_slice %35 {offsets = [0, 128], sizes = [16, 32], strides = [1, 1]} : vector<16x256xbf16> to vector<16x32xbf16>
    %cst_38 = arith.constant dense<0.000000e+00> : vector<16x16xf32>
    %119 = tpu.matmul %116, %117, %cst_38 {dimension_numbers = #tpu.dot_dimension_numbers<[1], [1], [0], [0], [0, 0, 1, 0], [], []>} : vector<16x32xbf16>, vector<16x32xbf16>, vector<16x16xf32> -> vector<16x16xf32>
    %c4 = arith.constant 4 : index
    %c0_39 = arith.constant 0 : index
    %c0_40 = arith.constant 0 : index
    %120 = vector.load %arg7[%c4, %c0_39, %c0_40] : memref<8x16x16xbf16, #tpu.memory_space<vmem>>, vector<1x16x16xbf16>
    %121 = vector.shape_cast %120 : vector<1x16x16xbf16> to vector<16x16xbf16>
    %122 = arith.extf %121 : vector<16x16xbf16> to vector<16x16xf32>
    %123 = arith.addf %119, %122 : vector<16x16xf32>
    %cst_41 = arith.constant dense<0xFF800000> : vector<16xf32>
    %124 = vector.multi_reduction <maximumf>, %123, %cst_41 [1] : vector<16x16xf32> to vector<16xf32>
    %125 = vector.shape_cast %124 : vector<16xf32> to vector<16x1xf32>
    %126 = vector.broadcast %125 : vector<16x1xf32> to vector<16x16xf32>
    %127 = arith.subf %123, %126 : vector<16x16xf32>
    %128 = math.exp %127 : vector<16x16xf32>
    %cst_42 = arith.constant dense<0.000000e+00> : vector<16xf32>
    %129 = vector.multi_reduction <add>, %128, %cst_42 [1] : vector<16x16xf32> to vector<16xf32>
    %130 = vector.shape_cast %129 : vector<16xf32> to vector<16x1xf32>
    %131 = tpu.reciprocal %130 {approx = true} : vector<16x1xf32> -> vector<16x1xf32>
    %132 = vector.broadcast %131 : vector<16x1xf32> to vector<16x16xf32>
    %133 = arith.mulf %128, %132 : vector<16x16xf32>
    %134 = arith.truncf %133 : vector<16x16xf32> to vector<16x16xbf16>
    %cst_43 = arith.constant dense<0.000000e+00> : vector<16x32xf32>
    %135 = tpu.matmul %134, %118, %cst_43 {dimension_numbers = #tpu.dot_dimension_numbers<[1], [0], [0], [1], [0, 0, 1, 1], [], []>} : vector<16x16xbf16>, vector<16x32xbf16>, vector<16x32xf32> -> vector<16x32xf32>
    %136 = vector.extract_strided_slice %31 {offsets = [0, 160], sizes = [16, 32], strides = [1, 1]} : vector<16x256xbf16> to vector<16x32xbf16>
    %137 = vector.extract_strided_slice %33 {offsets = [0, 160], sizes = [16, 32], strides = [1, 1]} : vector<16x256xbf16> to vector<16x32xbf16>
    %138 = vector.extract_strided_slice %35 {offsets = [0, 160], sizes = [16, 32], strides = [1, 1]} : vector<16x256xbf16> to vector<16x32xbf16>
    %cst_44 = arith.constant dense<0.000000e+00> : vector<16x16xf32>
    %139 = tpu.matmul %136, %137, %cst_44 {dimension_numbers = #tpu.dot_dimension_numbers<[1], [1], [0], [0], [0, 0, 1, 0], [], []>} : vector<16x32xbf16>, vector<16x32xbf16>, vector<16x16xf32> -> vector<16x16xf32>
    %c5 = arith.constant 5 : index
    %c0_45 = arith.constant 0 : index
    %c0_46 = arith.constant 0 : index
    %140 = vector.load %arg7[%c5, %c0_45, %c0_46] : memref<8x16x16xbf16, #tpu.memory_space<vmem>>, vector<1x16x16xbf16>
    %141 = vector.shape_cast %140 : vector<1x16x16xbf16> to vector<16x16xbf16>
    %142 = arith.extf %141 : vector<16x16xbf16> to vector<16x16xf32>
    %143 = arith.addf %139, %142 : vector<16x16xf32>
    %cst_47 = arith.constant dense<0xFF800000> : vector<16xf32>
    %144 = vector.multi_reduction <maximumf>, %143, %cst_47 [1] : vector<16x16xf32> to vector<16xf32>
    %145 = vector.shape_cast %144 : vector<16xf32> to vector<16x1xf32>
    %146 = vector.broadcast %145 : vector<16x1xf32> to vector<16x16xf32>
    %147 = arith.subf %143, %146 : vector<16x16xf32>
    %148 = math.exp %147 : vector<16x16xf32>
    %cst_48 = arith.constant dense<0.000000e+00> : vector<16xf32>
    %149 = vector.multi_reduction <add>, %148, %cst_48 [1] : vector<16x16xf32> to vector<16xf32>
    %150 = vector.shape_cast %149 : vector<16xf32> to vector<16x1xf32>
    %151 = tpu.reciprocal %150 {approx = true} : vector<16x1xf32> -> vector<16x1xf32>
    %152 = vector.broadcast %151 : vector<16x1xf32> to vector<16x16xf32>
    %153 = arith.mulf %148, %152 : vector<16x16xf32>
    %154 = arith.truncf %153 : vector<16x16xf32> to vector<16x16xbf16>
    %cst_49 = arith.constant dense<0.000000e+00> : vector<16x32xf32>
    %155 = tpu.matmul %154, %138, %cst_49 {dimension_numbers = #tpu.dot_dimension_numbers<[1], [0], [0], [1], [0, 0, 1, 1], [], []>} : vector<16x16xbf16>, vector<16x32xbf16>, vector<16x32xf32> -> vector<16x32xf32>
    %156 = vector.extract_strided_slice %31 {offsets = [0, 192], sizes = [16, 32], strides = [1, 1]} : vector<16x256xbf16> to vector<16x32xbf16>
    %157 = vector.extract_strided_slice %33 {offsets = [0, 192], sizes = [16, 32], strides = [1, 1]} : vector<16x256xbf16> to vector<16x32xbf16>
    %158 = vector.extract_strided_slice %35 {offsets = [0, 192], sizes = [16, 32], strides = [1, 1]} : vector<16x256xbf16> to vector<16x32xbf16>
    %cst_50 = arith.constant dense<0.000000e+00> : vector<16x16xf32>
    %159 = tpu.matmul %156, %157, %cst_50 {dimension_numbers = #tpu.dot_dimension_numbers<[1], [1], [0], [0], [0, 0, 1, 0], [], []>} : vector<16x32xbf16>, vector<16x32xbf16>, vector<16x16xf32> -> vector<16x16xf32>
    %c6 = arith.constant 6 : index
    %c0_51 = arith.constant 0 : index
    %c0_52 = arith.constant 0 : index
    %160 = vector.load %arg7[%c6, %c0_51, %c0_52] : memref<8x16x16xbf16, #tpu.memory_space<vmem>>, vector<1x16x16xbf16>
    %161 = vector.shape_cast %160 : vector<1x16x16xbf16> to vector<16x16xbf16>
    %162 = arith.extf %161 : vector<16x16xbf16> to vector<16x16xf32>
    %163 = arith.addf %159, %162 : vector<16x16xf32>
    %cst_53 = arith.constant dense<0xFF800000> : vector<16xf32>
    %164 = vector.multi_reduction <maximumf>, %163, %cst_53 [1] : vector<16x16xf32> to vector<16xf32>
    %165 = vector.shape_cast %164 : vector<16xf32> to vector<16x1xf32>
    %166 = vector.broadcast %165 : vector<16x1xf32> to vector<16x16xf32>
    %167 = arith.subf %163, %166 : vector<16x16xf32>
    %168 = math.exp %167 : vector<16x16xf32>
    %cst_54 = arith.constant dense<0.000000e+00> : vector<16xf32>
    %169 = vector.multi_reduction <add>, %168, %cst_54 [1] : vector<16x16xf32> to vector<16xf32>
    %170 = vector.shape_cast %169 : vector<16xf32> to vector<16x1xf32>
    %171 = tpu.reciprocal %170 {approx = true} : vector<16x1xf32> -> vector<16x1xf32>
    %172 = vector.broadcast %171 : vector<16x1xf32> to vector<16x16xf32>
    %173 = arith.mulf %168, %172 : vector<16x16xf32>
    %174 = arith.truncf %173 : vector<16x16xf32> to vector<16x16xbf16>
    %cst_55 = arith.constant dense<0.000000e+00> : vector<16x32xf32>
    %175 = tpu.matmul %174, %158, %cst_55 {dimension_numbers = #tpu.dot_dimension_numbers<[1], [0], [0], [1], [0, 0, 1, 1], [], []>} : vector<16x16xbf16>, vector<16x32xbf16>, vector<16x32xf32> -> vector<16x32xf32>
    %176 = vector.extract_strided_slice %31 {offsets = [0, 224], sizes = [16, 32], strides = [1, 1]} : vector<16x256xbf16> to vector<16x32xbf16>
    %177 = vector.extract_strided_slice %33 {offsets = [0, 224], sizes = [16, 32], strides = [1, 1]} : vector<16x256xbf16> to vector<16x32xbf16>
    %178 = vector.extract_strided_slice %35 {offsets = [0, 224], sizes = [16, 32], strides = [1, 1]} : vector<16x256xbf16> to vector<16x32xbf16>
    %cst_56 = arith.constant dense<0.000000e+00> : vector<16x16xf32>
    %179 = tpu.matmul %176, %177, %cst_56 {dimension_numbers = #tpu.dot_dimension_numbers<[1], [1], [0], [0], [0, 0, 1, 0], [], []>} : vector<16x32xbf16>, vector<16x32xbf16>, vector<16x16xf32> -> vector<16x16xf32>
    %c7 = arith.constant 7 : index
    %c0_57 = arith.constant 0 : index
    %c0_58 = arith.constant 0 : index
    %180 = vector.load %arg7[%c7, %c0_57, %c0_58] : memref<8x16x16xbf16, #tpu.memory_space<vmem>>, vector<1x16x16xbf16>
    %181 = vector.shape_cast %180 : vector<1x16x16xbf16> to vector<16x16xbf16>
    %182 = arith.extf %181 : vector<16x16xbf16> to vector<16x16xf32>
    %183 = arith.addf %179, %182 : vector<16x16xf32>
    %cst_59 = arith.constant dense<0xFF800000> : vector<16xf32>
    %184 = vector.multi_reduction <maximumf>, %183, %cst_59 [1] : vector<16x16xf32> to vector<16xf32>
    %185 = vector.shape_cast %184 : vector<16xf32> to vector<16x1xf32>
    %186 = vector.broadcast %185 : vector<16x1xf32> to vector<16x16xf32>
    %187 = arith.subf %183, %186 : vector<16x16xf32>
    %188 = math.exp %187 : vector<16x16xf32>
    %cst_60 = arith.constant dense<0.000000e+00> : vector<16xf32>
    %189 = vector.multi_reduction <add>, %188, %cst_60 [1] : vector<16x16xf32> to vector<16xf32>
    %190 = vector.shape_cast %189 : vector<16xf32> to vector<16x1xf32>
    %191 = tpu.reciprocal %190 {approx = true} : vector<16x1xf32> -> vector<16x1xf32>
    %192 = vector.broadcast %191 : vector<16x1xf32> to vector<16x16xf32>
    %193 = arith.mulf %188, %192 : vector<16x16xf32>
    %194 = arith.truncf %193 : vector<16x16xf32> to vector<16x16xbf16>
    %cst_61 = arith.constant dense<0.000000e+00> : vector<16x32xf32>
    %195 = tpu.matmul %194, %178, %cst_61 {dimension_numbers = #tpu.dot_dimension_numbers<[1], [0], [0], [1], [0, 0, 1, 1], [], []>} : vector<16x16xbf16>, vector<16x32xbf16>, vector<16x32xf32> -> vector<16x32xf32>
    %196 = tpu.concatenate %55, %75, %95, %115, %135, %155, %175, %195 in 1 : vector<16x32xf32>, vector<16x32xf32>, vector<16x32xf32>, vector<16x32xf32>, vector<16x32xf32>, vector<16x32xf32>, vector<16x32xf32>, vector<16x32xf32> -> vector<16x256xf32>
    %197 = arith.truncf %196 : vector<16x256xf32> to vector<16x256xbf16>
    %c0_62 = arith.constant 0 : index
    %c0_63 = arith.constant 0 : index
    %198 = vector.load %arg5[%c0_62, %c0_63] : memref<256x32xbf16, #tpu.memory_space<vmem>>, vector<256x32xbf16>
    %cst_64 = arith.constant dense<0.000000e+00> : vector<16x32xf32>
    %199 = tpu.matmul %197, %198, %cst_64 {dimension_numbers = #tpu.dot_dimension_numbers<[1], [0], [0], [1], [0, 0, 1, 1], [], []>} : vector<16x256xbf16>, vector<256x32xbf16>, vector<16x32xf32> -> vector<16x32xf32>
    %200 = arith.addf %2, %199 : vector<16x32xf32>
    %c0_65 = arith.constant 0 : index
    %c0_66 = arith.constant 0 : index
    %201 = vector.load %arg6[%c0_65, %c0_66] : memref<1x32xf32, #tpu.memory_space<vmem>>, vector<1x32xf32>
    %202 = vector.broadcast %201 : vector<1x32xf32> to vector<16x32xf32>
    %203 = arith.addf %200, %202 : vector<16x32xf32>
    %c0_67 = arith.constant 0 : index
    %c0_68 = arith.constant 0 : index
    %204 = vector.load %arg8[%c0_67, %c0_68] : memref<1x32xf32, #tpu.memory_space<vmem>>, vector<1x32xf32>
    %c0_69 = arith.constant 0 : index
    %c0_70 = arith.constant 0 : index
    %205 = vector.load %arg9[%c0_69, %c0_70] : memref<1x32xf32, #tpu.memory_space<vmem>>, vector<1x32xf32>
    %cst_71 = arith.constant dense<0.000000e+00> : vector<16xf32>
    %206 = vector.multi_reduction <add>, %203, %cst_71 [1] : vector<16x32xf32> to vector<16xf32>
    %207 = vector.shape_cast %206 : vector<16xf32> to vector<16x1xf32>
    %cst_72 = arith.constant 3.200000e+01 : f32
    %208 = vector.broadcast %cst_72 : f32 to vector<16x1xf32>
    %209 = arith.divf %207, %208 : vector<16x1xf32>
    %210 = vector.broadcast %209 : vector<16x1xf32> to vector<16x32xf32>
    %211 = arith.subf %203, %210 : vector<16x32xf32>
    %212 = arith.mulf %211, %211 : vector<16x32xf32>
    %cst_73 = arith.constant dense<0.000000e+00> : vector<16xf32>
    %213 = vector.multi_reduction <add>, %212, %cst_73 [1] : vector<16x32xf32> to vector<16xf32>
    %214 = vector.shape_cast %213 : vector<16xf32> to vector<16x1xf32>
    %cst_74 = arith.constant 3.200000e+01 : f32
    %215 = vector.broadcast %cst_74 : f32 to vector<16x1xf32>
    %216 = arith.divf %214, %215 : vector<16x1xf32>
    %217 = vector.broadcast %209 : vector<16x1xf32> to vector<16x32xf32>
    %218 = arith.subf %203, %217 : vector<16x32xf32>
    %cst_75 = arith.constant 9.99999974E-6 : f32
    %219 = vector.broadcast %cst_75 : f32 to vector<16x1xf32>
    %220 = arith.addf %216, %219 : vector<16x1xf32>
    %221 = math.rsqrt %220 : vector<16x1xf32>
    %222 = vector.broadcast %221 : vector<16x1xf32> to vector<16x32xf32>
    %223 = arith.mulf %218, %222 : vector<16x32xf32>
    %224 = vector.broadcast %204 : vector<1x32xf32> to vector<16x32xf32>
    %225 = arith.mulf %223, %224 : vector<16x32xf32>
    %226 = vector.broadcast %205 : vector<1x32xf32> to vector<16x32xf32>
    %227 = arith.addf %225, %226 : vector<16x32xf32>
    %228 = arith.truncf %227 : vector<16x32xf32> to vector<16x32xbf16>
    %c0_76 = arith.constant 0 : index
    %c0_77 = arith.constant 0 : index
    %229 = vector.load %arg10[%c0_76, %c0_77] : memref<32x128xbf16, #tpu.memory_space<vmem>>, vector<32x128xbf16>
    %cst_78 = arith.constant dense<0.000000e+00> : vector<16x128xf32>
    %230 = tpu.matmul %228, %229, %cst_78 {dimension_numbers = #tpu.dot_dimension_numbers<[1], [0], [0], [1], [0, 0, 1, 1], [], []>} : vector<16x32xbf16>, vector<32x128xbf16>, vector<16x128xf32> -> vector<16x128xf32>
    %c0_79 = arith.constant 0 : index
    %c0_80 = arith.constant 0 : index
    %231 = vector.load %arg11[%c0_79, %c0_80] : memref<1x128xf32, #tpu.memory_space<vmem>>, vector<1x128xf32>
    %232 = vector.broadcast %231 : vector<1x128xf32> to vector<16x128xf32>
    %233 = arith.addf %230, %232 : vector<16x128xf32>
    %cst_81 = arith.constant 5.000000e-01 : f32
    %234 = vector.broadcast %cst_81 : f32 to vector<16x128xf32>
    %235 = arith.mulf %234, %233 : vector<16x128xf32>
    %cst_82 = arith.constant 0.707106769 : f32
    %236 = vector.broadcast %cst_82 : f32 to vector<16x128xf32>
    %237 = arith.mulf %233, %236 : vector<16x128xf32>
    %238 = math.erf %237 : vector<16x128xf32>
    %cst_83 = arith.constant 1.000000e+00 : f32
    %239 = vector.broadcast %cst_83 : f32 to vector<16x128xf32>
    %240 = arith.addf %239, %238 : vector<16x128xf32>
    %241 = arith.mulf %235, %240 : vector<16x128xf32>
    %242 = arith.truncf %241 : vector<16x128xf32> to vector<16x128xbf16>
    %c0_84 = arith.constant 0 : index
    %c0_85 = arith.constant 0 : index
    %243 = vector.load %arg12[%c0_84, %c0_85] : memref<128x32xbf16, #tpu.memory_space<vmem>>, vector<128x32xbf16>
    %cst_86 = arith.constant dense<0.000000e+00> : vector<16x32xf32>
    %244 = tpu.matmul %242, %243, %cst_86 {dimension_numbers = #tpu.dot_dimension_numbers<[1], [0], [0], [1], [0, 0, 1, 1], [], []>} : vector<16x128xbf16>, vector<128x32xbf16>, vector<16x32xf32> -> vector<16x32xf32>
    %c0_87 = arith.constant 0 : index
    %c0_88 = arith.constant 0 : index
    %245 = vector.load %arg13[%c0_87, %c0_88] : memref<1x32xf32, #tpu.memory_space<vmem>>, vector<1x32xf32>
    %246 = vector.broadcast %245 : vector<1x32xf32> to vector<16x32xf32>
    %247 = arith.addf %244, %246 : vector<16x32xf32>
    %248 = arith.addf %203, %247 : vector<16x32xf32>
    %249 = tpu.transpose %248, [1, 0] : vector<16x32xf32> -> vector<32x16xf32>
    %c0_89 = arith.constant 0 : index
    %c0_90 = arith.constant 0 : index
    %c0_91 = arith.constant 0 : index
    %250 = vector.load %arg14[%c0_89, %c0_90, %c0_91] : memref<1x32x16xf32, #tpu.memory_space<vmem>>, vector<1x32x16xf32>
    %251 = vector.shape_cast %250 : vector<1x32x16xf32> to vector<32x16xf32>
    %252 = vector.shape_cast %249 : vector<32x16xf32> to vector<1x32x16xf32>
    tpu.vector_store %arg14[%c0_89, %c0_90, %c0_91], %252 {strides = array<i32>} : memref<1x32x16xf32, #tpu.memory_space<vmem>>, vector<1x32x16xf32>,
    return
  }
  func.func @transform_0(%arg0: i32) -> (i32, i32, i32) {
    %c0_i32 = arith.constant 0 : i32
    %c0_i32_0 = arith.constant 0 : i32
    %c0_i32_1 = arith.constant 0 : i32
    return %arg0, %c0_i32, %c0_i32_0 : i32, i32, i32
  }
  func.func @transform_1(%arg0: i32) -> (i32, i32) {
    %c0_i32 = arith.constant 0 : i32
    %c0_i32_0 = arith.constant 0 : i32
    %c0_i32_1 = arith.constant 0 : i32
    return %c0_i32, %c0_i32_0 : i32, i32
  }
  func.func @transform_2(%arg0: i32) -> (i32, i32) {
    %c0_i32 = arith.constant 0 : i32
    %c0_i32_0 = arith.constant 0 : i32
    %c0_i32_1 = arith.constant 0 : i32
    return %c0_i32, %c0_i32_0 : i32, i32
  }
  func.func @transform_3(%arg0: i32) -> (i32, i32) {
    %c0_i32 = arith.constant 0 : i32
    %c0_i32_0 = arith.constant 0 : i32
    %c0_i32_1 = arith.constant 0 : i32
    return %c0_i32, %c0_i32_0 : i32, i32
  }
  func.func @transform_4(%arg0: i32) -> (i32, i32) {
    %c0_i32 = arith.constant 0 : i32
    %c0_i32_0 = arith.constant 0 : i32
    %c0_i32_1 = arith.constant 0 : i32
    return %c0_i32, %c0_i32_0 : i32, i32
  }
  func.func @transform_5(%arg0: i32) -> (i32, i32) {
    %c0_i32 = arith.constant 0 : i32
    %c0_i32_0 = arith.constant 0 : i32
    %c0_i32_1 = arith.constant 0 : i32
    return %c0_i32, %c0_i32_0 : i32, i32
  }
  func.func @transform_6(%arg0: i32) -> (i32, i32, i32) {
    %c0_i32 = arith.constant 0 : i32
    %c0_i32_0 = arith.constant 0 : i32
    %c0_i32_1 = arith.constant 0 : i32
    %c0_i32_2 = arith.constant 0 : i32
    return %c0_i32, %c0_i32_0, %c0_i32_1 : i32, i32, i32
  }
  func.func @transform_7(%arg0: i32) -> (i32, i32) {
    %c0_i32 = arith.constant 0 : i32
    %c0_i32_0 = arith.constant 0 : i32
    %c0_i32_1 = arith.constant 0 : i32
    return %c0_i32, %c0_i32_0 : i32, i32
  }
  func.func @transform_8(%arg0: i32) -> (i32, i32) {
    %c0_i32 = arith.constant 0 : i32
    %c0_i32_0 = arith.constant 0 : i32
    %c0_i32_1 = arith.constant 0 : i32
    return %c0_i32, %c0_i32_0 : i32, i32
  }
  func.func @transform_9(%arg0: i32) -> (i32, i32) {
    %c0_i32 = arith.constant 0 : i32
    %c0_i32_0 = arith.constant 0 : i32
    %c0_i32_1 = arith.constant 0 : i32
    return %c0_i32, %c0_i32_0 : i32, i32
  }
  func.func @transform_10(%arg0: i32) -> (i32, i32) {
    %c0_i32 = arith.constant 0 : i32
    %c0_i32_0 = arith.constant 0 : i32
    %c0_i32_1 = arith.constant 0 : i32
    return %c0_i32, %c0_i32_0 : i32, i32
  }
  func.func @transform_11(%arg0: i32) -> (i32, i32) {
    %c0_i32 = arith.constant 0 : i32
    %c0_i32_0 = arith.constant 0 : i32
    %c0_i32_1 = arith.constant 0 : i32
    return %c0_i32, %c0_i32_0 : i32, i32
  }
  func.func @transform_12(%arg0: i32) -> (i32, i32) {
    %c0_i32 = arith.constant 0 : i32
    %c0_i32_0 = arith.constant 0 : i32
    %c0_i32_1 = arith.constant 0 : i32
    return %c0_i32, %c0_i32_0 : i32, i32
  }
  func.func @transform_13(%arg0: i32) -> (i32, i32, i32) {
    %c0_i32 = arith.constant 0 : i32
    %c0_i32_0 = arith.constant 0 : i32
    %c0_i32_1 = arith.constant 0 : i32
    return %arg0, %c0_i32, %c0_i32_0 : i32, i32, i32
  }
}

</mosaic_0001>

<llo_original>
// kernel: transformer_forward.1
$region0: #{transformer_forward.1}
  #allocation0 [shape = 'u32[]', space=smem, size = 0x4, offset = 0x4, fixed_abs, tag = 'smem constant byte address 0x4 - core index']
  #allocation1 [shape = 'u32[72,128]{1,0:T(1,128)}', space=vmem, size = 0x9000, scoped, tag = 'internal scratch']
  %s0 = inlined_call_operand.vmem [shape: f32[2,32,16], index: 0, kind: input, shape index: {}]
  %s1 = inlined_call_operand.vmem [shape: f32[1,32], index: 1, kind: input, shape index: {}]
  %s2 = inlined_call_operand.vmem [shape: f32[1,32], index: 2, kind: input, shape index: {}]
  %s3 = inlined_call_operand.vmem [shape: bf16[32,768], index: 3, kind: input, shape index: {}]
  %s4 = inlined_call_operand.vmem [shape: bf16[256,32], index: 4, kind: input, shape index: {}]
  %s5 = inlined_call_operand.vmem [shape: f32[1,32], index: 5, kind: input, shape index: {}]
  %s6 = inlined_call_operand.vmem [shape: bf16[8,16,16], index: 6, kind: input, shape index: {}]
  %s7 = inlined_call_operand.vmem [shape: f32[1,32], index: 7, kind: input, shape index: {}]
  %s8 = inlined_call_operand.vmem [shape: f32[1,32], index: 8, kind: input, shape index: {}]
  %s9 = inlined_call_operand.vmem [shape: bf16[32,128], index: 9, kind: input, shape index: {}]
  %s10 = inlined_call_operand.vmem [shape: f32[1,128], index: 10, kind: input, shape index: {}]
  %s11 = inlined_call_operand.vmem [shape: bf16[128,32], index: 11, kind: input, shape index: {}]
  %s12 = inlined_call_operand.vmem [shape: f32[1,32], index: 12, kind: input, shape index: {}]
  %s13 = inlined_call_operand.vmem [shape: f32[2,32,16], index: 13, kind: output, shape index: {}]
  %s14 = sld [smem:[#allocation0]]
  $region85: #{transformer_forward.1} parent=0
    _
  %s16 = ssub.s32 1, %s14
  %s17 = scalar_select 0, %s16, %s14
  loop: start=0, step=1, limit=4
  $region2: #{transformer_forward.1} parent=0 // loop_pre_header
    _
  $region3: #{transformer_forward.1} parent=0 // loop_header
    %s19 = sphi 0, %s23
    %p20 = scmp.ge.s32.totalorder %s19, 4
    %s29 = sphi 0, %s31
    %s32 = sphi 0, %s29
    %s33 = sphi 0, %s32
    %s49 = sphi 0, %s33
    %s53 = sphi 0, %s53
    %s55 = sphi 0, %s53
    %s56 = sphi 0, %s55
    %s70 = sphi 0, %s56
    %s74 = sphi 0, %s74
    %s76 = sphi 0, %s74
    %s77 = sphi 0, %s76
    %s91 = sphi 0, %s77
    %s95 = sphi 0, %s95
    %s97 = sphi 0, %s95
    %s98 = sphi 0, %s97
    %s112 = sphi 0, %s98
    %s116 = sphi 0, %s116
    %s118 = sphi 0, %s116
    %s119 = sphi 0, %s118
    %s133 = sphi 0, %s119
    %s137 = sphi 0, %s137
    %s139 = sphi 0, %s137
    %s140 = sphi 0, %s139
    %s154 = sphi 0, %s140
    %s158 = sphi 0, %s158
    %s160 = sphi 0, %s158
    %s161 = sphi 0, %s160
    %s175 = sphi 0, %s161
    %s179 = sphi 0, %s179
    %s181 = sphi 0, %s179
    %s182 = sphi 0, %s181
    %s196 = sphi 0, %s182
    %s200 = sphi 0, %s200
    %s202 = sphi 0, %s200
    %s203 = sphi 0, %s202
    %s217 = sphi 0, %s203
    %s221 = sphi 0, %s221
    %s223 = sphi 0, %s221
    %s224 = sphi 0, %s223
    %s238 = sphi 0, %s224
    %s242 = sphi 0, %s242
    %s244 = sphi 0, %s242
    %s245 = sphi 0, %s244
    %s259 = sphi 0, %s245
    %s263 = sphi 0, %s263
    %s265 = sphi 0, %s263
    %s266 = sphi 0, %s265
    %s280 = sphi 0, %s266
    %s284 = sphi 0, %s284
    %s286 = sphi 0, %s284
    %s287 = sphi 0, %s286
    %s301 = sphi 0, %s287
    %s307 = sphi 0, %s309
    %s310 = sphi 0, %s307
    %s311 = sphi 0, %s310
    %s327 = sphi 0, %s311
  $region4: #{transformer_forward.1} parent=0 // loop_header_branch
    %22 = sbr.rel (%p20) target = $region8
  $region5: #{transformer_forward.1} parent=0 // loop_body
    %s24 = ssub.s32 %s19, 1
    %s25 = ssub.s32 %s19, 2
    %s26 = sadd.s32 %s19, 1
    %s27 = ssub.s32 %s19, %s26
    %p28 = scmp.eq.s32.totalorder %s27, 0
    %s30 = sadd.s32 %s29, 1
    %s31 = scalar_select %p28, %s29, %s30
    %p34 = pneg %p28
    %p35 = scmp.eq.s32.totalorder %s19, 1
    %p36 = por %p34, %p35
    %p37 = scmp.ne.s32.totalorder %s29, %s32
    %p38 = scmp.eq.s32.totalorder %s19, 0
    %p39 = por %p37, %p38
    %p40 = scmp.ne.s32.totalorder %s29, %s32
    %p41 = scmp.eq.s32.totalorder %s24, 1
    %p42 = por %p40, %p41
    %p43 = scmp.ne.s32.totalorder %s32, %s33
    %p44 = scmp.eq.s32.totalorder %s24, 0
    %p45 = por %p43, %p44
    %p46 = scmp.ne.s32.totalorder %s32, %s33
    %p47 = scmp.eq.s32.totalorder %s25, 1
    %p48 = por %p46, %p47
    %p50 = scmp.ne.s32.totalorder %s33, %s49
    %p51 = scmp.eq.s32.totalorder %s25, 0
    %p52 = por %p50, %p51
    %s54 = sadd.s32 %s53, 1
    %p57 = scmp.eq.s32.totalorder %s19, 1
    %p58 = scmp.ne.s32.totalorder %s53, %s55
    %p59 = scmp.eq.s32.totalorder %s19, 0
    %p60 = por %p58, %p59
    %p61 = scmp.ne.s32.totalorder %s53, %s55
    %p62 = scmp.eq.s32.totalorder %s24, 1
    %p63 = por %p61, %p62
    %p64 = scmp.ne.s32.totalorder %s55, %s56
    %p65 = scmp.eq.s32.totalorder %s24, 0
    %p66 = por %p64, %p65
    %p67 = scmp.ne.s32.totalorder %s55, %s56
    %p68 = scmp.eq.s32.totalorder %s25, 1
    %p69 = por %p67, %p68
    %p71 = scmp.ne.s32.totalorder %s56, %s70
    %p72 = scmp.eq.s32.totalorder %s25, 0
    %p73 = por %p71, %p72
    %s75 = sadd.s32 %s74, 1
    %p78 = scmp.eq.s32.totalorder %s19, 1
    %p79 = scmp.ne.s32.totalorder %s74, %s76
    %p80 = scmp.eq.s32.totalorder %s19, 0
    %p81 = por %p79, %p80
    %p82 = scmp.ne.s32.totalorder %s74, %s76
    %p83 = scmp.eq.s32.totalorder %s24, 1
    %p84 = por %p82, %p83
    %p85 = scmp.ne.s32.totalorder %s76, %s77
    %p86 = scmp.eq.s32.totalorder %s24, 0
    %p87 = por %p85, %p86
    %p88 = scmp.ne.s32.totalorder %s76, %s77
    %p89 = scmp.eq.s32.totalorder %s25, 1
    %p90 = por %p88, %p89
    %p92 = scmp.ne.s32.totalorder %s77, %s91
    %p93 = scmp.eq.s32.totalorder %s25, 0
    %p94 = por %p92, %p93
    %s96 = sadd.s32 %s95, 1
    %p99 = scmp.eq.s32.totalorder %s19, 1
    %p100 = scmp.ne.s32.totalorder %s95, %s97
    %p101 = scmp.eq.s32.totalorder %s19, 0
    %p102 = por %p100, %p101
    %p103 = scmp.ne.s32.totalorder %s95, %s97
    %p104 = scmp.eq.s32.totalorder %s24, 1
    %p105 = por %p103, %p104
    %p106 = scmp.ne.s32.totalorder %s97, %s98
    %p107 = scmp.eq.s32.totalorder %s24, 0
    %p108 = por %p106, %p107
    %p109 = scmp.ne.s32.totalorder %s97, %s98
    %p110 = scmp.eq.s32.totalorder %s25, 1
    %p111 = por %p109, %p110
    %p113 = scmp.ne.s32.totalorder %s98, %s112
    %p114 = scmp.eq.s32.totalorder %s25, 0
    %p115 = por %p113, %p114
    %s117 = sadd.s32 %s116, 1
    %p120 = scmp.eq.s32.totalorder %s19, 1
    %p121 = scmp.ne.s32.totalorder %s116, %s118
    %p122 = scmp.eq.s32.totalorder %s19, 0
    %p123 = por %p121, %p122
    %p124 = scmp.ne.s32.totalorder %s116, %s118
    %p125 = scmp.eq.s32.totalorder %s24, 1
    %p126 = por %p124, %p125
    %p127 = scmp.ne.s32.totalorder %s118, %s119
    %p128 = scmp.eq.s32.totalorder %s24, 0
    %p129 = por %p127, %p128
    %p130 = scmp.ne.s32.totalorder %s118, %s119
    %p131 = scmp.eq.s32.totalorder %s25, 1
    %p132 = por %p130, %p131
    %p134 = scmp.ne.s32.totalorder %s119, %s133
    %p135 = scmp.eq.s32.totalorder %s25, 0
    %p136 = por %p134, %p135
    %s138 = sadd.s32 %s137, 1
    %p141 = scmp.eq.s32.totalorder %s19, 1
    %p142 = scmp.ne.s32.totalorder %s137, %s139
    %p143 = scmp.eq.s32.totalorder %s19, 0
    %p144 = por %p142, %p143
    %p145 = scmp.ne.s32.totalorder %s137, %s139
    %p146 = scmp.eq.s32.totalorder %s24, 1
    %p147 = por %p145, %p146
    %p148 = scmp.ne.s32.totalorder %s139, %s140
    %p149 = scmp.eq.s32.totalorder %s24, 0
    %p150 = por %p148, %p149
    %p151 = scmp.ne.s32.totalorder %s139, %s140
    %p152 = scmp.eq.s32.totalorder %s25, 1
    %p153 = por %p151, %p152
    %p155 = scmp.ne.s32.totalorder %s140, %s154
    %p156 = scmp.eq.s32.totalorder %s25, 0
    %p157 = por %p155, %p156
    %s159 = sadd.s32 %s158, 1
    %p162 = scmp.eq.s32.totalorder %s19, 1
    %p163 = scmp.ne.s32.totalorder %s158, %s160
    %p164 = scmp.eq.s32.totalorder %s19, 0
    %p165 = por %p163, %p164
    %p166 = scmp.ne.s32.totalorder %s158, %s160
    %p167 = scmp.eq.s32.totalorder %s24, 1
    %p168 = por %p166, %p167
    %p169 = scmp.ne.s32.totalorder %s160, %s161
    %p170 = scmp.eq.s32.totalorder %s24, 0
    %p171 = por %p169, %p170
    %p172 = scmp.ne.s32.totalorder %s160, %s161
    %p173 = scmp.eq.s32.totalorder %s25, 1
    %p174 = por %p172, %p173
    %p176 = scmp.ne.s32.totalorder %s161, %s175
    %p177 = scmp.eq.s32.totalorder %s25, 0
    %p178 = por %p176, %p177
    %s180 = sadd.s32 %s179, 1
    %p183 = scmp.eq.s32.totalorder %s19, 1
    %p184 = scmp.ne.s32.totalorder %s179, %s181
    %p185 = scmp.eq.s32.totalorder %s19, 0
    %p186 = por %p184, %p185
    %p187 = scmp.ne.s32.totalorder %s179, %s181
    %p188 = scmp.eq.s32.totalorder %s24, 1
    %p189 = por %p187, %p188
    %p190 = scmp.ne.s32.totalorder %s181, %s182
    %p191 = scmp.eq.s32.totalorder %s24, 0
    %p192 = por %p190, %p191
    %p193 = scmp.ne.s32.totalorder %s181, %s182
    %p194 = scmp.eq.s32.totalorder %s25, 1
    %p195 = por %p193, %p194
    %p197 = scmp.ne.s32.totalorder %s182, %s196
    %p198 = scmp.eq.s32.totalorder %s25, 0
    %p199 = por %p197, %p198
    %s201 = sadd.s32 %s200, 1
    %p204 = scmp.eq.s32.totalorder %s19, 1
    %p205 = scmp.ne.s32.totalorder %s200, %s202
    %p206 = scmp.eq.s32.totalorder %s19, 0
    %p207 = por %p205, %p206
    %p208 = scmp.ne.s32.totalorder %s200, %s202
    %p209 = scmp.eq.s32.totalorder %s24, 1
    %p210 = por %p208, %p209
    %p211 = scmp.ne.s32.totalorder %s202, %s203
    %p212 = scmp.eq.s32.totalorder %s24, 0
    %p213 = por %p211, %p212
    %p214 = scmp.ne.s32.totalorder %s202, %s203
    %p215 = scmp.eq.s32.totalorder %s25, 1
    %p216 = por %p214, %p215
    %p218 = scmp.ne.s32.totalorder %s203, %s217
    %p219 = scmp.eq.s32.totalorder %s25, 0
    %p220 = por %p218, %p219
    %s222 = sadd.s32 %s221, 1
    %p225 = scmp.eq.s32.totalorder %s19, 1
    %p226 = scmp.ne.s32.totalorder %s221, %s223
    %p227 = scmp.eq.s32.totalorder %s19, 0
    %p228 = por %p226, %p227
    %p229 = scmp.ne.s32.totalorder %s221, %s223
    %p230 = scmp.eq.s32.totalorder %s24, 1
    %p231 = por %p229, %p230
    %p232 = scmp.ne.s32.totalorder %s223, %s224
    %p233 = scmp.eq.s32.totalorder %s24, 0
    %p234 = por %p232, %p233
    %p235 = scmp.ne.s32.totalorder %s223, %s224
    %p236 = scmp.eq.s32.totalorder %s25, 1
    %p237 = por %p235, %p236
    %p239 = scmp.ne.s32.totalorder %s224, %s238
    %p240 = scmp.eq.s32.totalorder %s25, 0
    %p241 = por %p239, %p240
    %s243 = sadd.s32 %s242, 1
    %p246 = scmp.eq.s32.totalorder %s19, 1
    %p247 = scmp.ne.s32.totalorder %s242, %s244
    %p248 = scmp.eq.s32.totalorder %s19, 0
    %p249 = por %p247, %p248
    %p250 = scmp.ne.s32.totalorder %s242, %s244
    %p251 = scmp.eq.s32.totalorder %s24, 1
    %p252 = por %p250, %p251
    %p253 = scmp.ne.s32.totalorder %s244, %s245
    %p254 = scmp.eq.s32.totalorder %s24, 0
    %p255 = por %p253, %p254
    %p256 = scmp.ne.s32.totalorder %s244, %s245
    %p257 = scmp.eq.s32.totalorder %s25, 1
    %p258 = por %p256, %p257
    %p260 = scmp.ne.s32.totalorder %s245, %s259
    %p261 = scmp.eq.s32.totalorder %s25, 0
    %p262 = por %p260, %p261
    %s264 = sadd.s32 %s263, 1
    %p267 = scmp.eq.s32.totalorder %s19, 1
    %p268 = scmp.ne.s32.totalorder %s263, %s265
    %p269 = scmp.eq.s32.totalorder %s19, 0
    %p270 = por %p268, %p269
    %p271 = scmp.ne.s32.totalorder %s263, %s265
    %p272 = scmp.eq.s32.totalorder %s24, 1
    %p273 = por %p271, %p272
    %p274 = scmp.ne.s32.totalorder %s265, %s266
    %p275 = scmp.eq.s32.totalorder %s24, 0
    %p276 = por %p274, %p275
    %p277 = scmp.ne.s32.totalorder %s265, %s266
    %p278 = scmp.eq.s32.totalorder %s25, 1
    %p279 = por %p277, %p278
    %p281 = scmp.ne.s32.totalorder %s266, %s280
    %p282 = scmp.eq.s32.totalorder %s25, 0
    %p283 = por %p281, %p282
    %s285 = sadd.s32 %s284, 1
    %p288 = scmp.eq.s32.totalorder %s19, 1
    %p289 = scmp.ne.s32.totalorder %s284, %s286
    %p290 = scmp.eq.s32.totalorder %s19, 0
    %p291 = por %p289, %p290
    %p292 = scmp.ne.s32.totalorder %s284, %s286
    %p293 = scmp.eq.s32.totalorder %s24, 1
    %p294 = por %p292, %p293
    %p295 = scmp.ne.s32.totalorder %s286, %s287
    %p296 = scmp.eq.s32.totalorder %s24, 0
    %p297 = por %p295, %p296
    %p298 = scmp.ne.s32.totalorder %s286, %s287
    %p299 = scmp.eq.s32.totalorder %s25, 1
    %p300 = por %p298, %p299
    %p302 = scmp.ne.s32.totalorder %s287, %s301
    %p303 = scmp.eq.s32.totalorder %s25, 0
    %p304 = por %p302, %p303
    %s305 = ssub.s32 %s19, %s26
    %p306 = scmp.eq.s32.totalorder %s305, 0
    %s308 = sadd.s32 %s307, 1
    %s309 = scalar_select %p306, %s307, %s308
    %p312 = pneg %p306
    %p313 = scmp.eq.s32.totalorder %s19, 1
    %p314 = por %p312, %p313
    %p315 = scmp.ne.s32.totalorder %s307, %s310
    %p316 = scmp.eq.s32.totalorder %s19, 0
    %p317 = por %p315, %p316
    %p318 = scmp.ne.s32.totalorder %s307, %s310
    %p319 = scmp.eq.s32.totalorder %s24, 1
    %p320 = por %p318, %p319
    %p321 = scmp.ne.s32.totalorder %s310, %s311
    %p322 = scmp.eq.s32.totalorder %s24, 0
    %p323 = por %p321, %p322
    %p324 = scmp.ne.s32.totalorder %s310, %s311
    %p325 = scmp.eq.s32.totalorder %s25, 1
    %p326 = por %p324, %p325
    %p328 = scmp.ne.s32.totalorder %s311, %s327
    %p329 = scmp.eq.s32.totalorder %s25, 0
    %p330 = por %p328, %p329
    %p331 = scmp.le.s32.totalorder 1, %s19
    %p332 = scmp.lt.s32.totalorder %s19, 3
    %p333 = pnand %p331, %p332
    %p334 = pneg %p333
    // Predicated region
    $region9: #{transformer_forward.1} parent=5 // pred_check
      _
    $region10: #{transformer_forward.1} parent=5 // pred_check_branch
      %336 = sbr.rel (%p333) target = $region12
    $region11: #{transformer_forward.1} parent=5 // pred_region
      %s337 = ssub.s32 %s19, 1
      // Predicated region
      $region13: #{transformer_forward.1} parent=11 // pred_check
        %p338 = pneg %p66
      $region14: #{transformer_forward.1} parent=11 // pred_check_branch
        %340 = sbr.rel (%p338) target = $region16
      $region15: #{transformer_forward.1} parent=11 // pred_region
        _
      $region16: #{transformer_forward.1} parent=11 // pred_fallthru
        _
      // Predicated region
      $region17: #{transformer_forward.1} parent=11 // pred_check
        %p341 = pneg %p87
      $region18: #{transformer_forward.1} parent=11 // pred_check_branch
        %343 = sbr.rel (%p341) target = $region20
      $region19: #{transformer_forward.1} parent=11 // pred_region
        _
      $region20: #{transformer_forward.1} parent=11 // pred_fallthru
        _
      // Predicated region
      $region21: #{transformer_forward.1} parent=11 // pred_check
        %p344 = pneg %p108
      $region22: #{transformer_forward.1} parent=11 // pred_check_branch
        %346 = sbr.rel (%p344) target = $region24
      $region23: #{transformer_forward.1} parent=11 // pred_region
        _
      $region24: #{transformer_forward.1} parent=11 // pred_fallthru
        _
      // Predicated region
      $region25: #{transformer_forward.1} parent=11 // pred_check
        %p347 = pneg %p129
      $region26: #{transformer_forward.1} parent=11 // pred_check_branch
        %349 = sbr.rel (%p347) target = $region28
      $region27: #{transformer_forward.1} parent=11 // pred_region
        _
      $region28: #{transformer_forward.1} parent=11 // pred_fallthru
        _
      // Predicated region
      $region29: #{transformer_forward.1} parent=11 // pred_check
        %p350 = pneg %p150
      $region30: #{transformer_forward.1} parent=11 // pred_check_branch
        %352 = sbr.rel (%p350) target = $region32
      $region31: #{transformer_forward.1} parent=11 // pred_region
        _
      $region32: #{transformer_forward.1} parent=11 // pred_fallthru
        _
      // Predicated region
      $region33: #{transformer_forward.1} parent=11 // pred_check
        %p353 = pneg %p171
      $region34: #{transformer_forward.1} parent=11 // pred_check_branch
        %355 = sbr.rel (%p353) target = $region36
      $region35: #{transformer_forward.1} parent=11 // pred_region
        _
      $region36: #{transformer_forward.1} parent=11 // pred_fallthru
        _
      // Predicated region
      $region37: #{transformer_forward.1} parent=11 // pred_check
        %p356 = pneg %p192
      $region38: #{transformer_forward.1} parent=11 // pred_check_branch
        %358 = sbr.rel (%p356) target = $region40
      $region39: #{transformer_forward.1} parent=11 // pred_region
        _
      $region40: #{transformer_forward.1} parent=11 // pred_fallthru
        _
      // Predicated region
      $region41: #{transformer_forward.1} parent=11 // pred_check
        %p359 = pneg %p213
      $region42: #{transformer_forward.1} parent=11 // pred_check_branch
        %361 = sbr.rel (%p359) target = $region44
      $region43: #{transformer_forward.1} parent=11 // pred_region
        _
      $region44: #{transformer_forward.1} parent=11 // pred_fallthru
        _
      // Predicated region
      $region45: #{transformer_forward.1} parent=11 // pred_check
        %p362 = pneg %p234
      $region46: #{transformer_forward.1} parent=11 // pred_check_branch
        %364 = sbr.rel (%p362) target = $region48
      $region47: #{transformer_forward.1} parent=11 // pred_region
        _
      $region48: #{transformer_forward.1} parent=11 // pred_fallthru
        _
      // Predicated region
      $region49: #{transformer_forward.1} parent=11 // pred_check
        %p365 = pneg %p255
      $region50: #{transformer_forward.1} parent=11 // pred_check_branch
        %367 = sbr.rel (%p365) target = $region52
      $region51: #{transformer_forward.1} parent=11 // pred_region
        _
      $region52: #{transformer_forward.1} parent=11 // pred_fallthru
        _
      // Predicated region
      $region53: #{transformer_forward.1} parent=11 // pred_check
        %p368 = pneg %p276
      $region54: #{transformer_forward.1} parent=11 // pred_check_branch
        %370 = sbr.rel (%p368) target = $region56
      $region55: #{transformer_forward.1} parent=11 // pred_region
        _
      $region56: #{transformer_forward.1} parent=11 // pred_fallthru
        _
      // Predicated region
      $region57: #{transformer_forward.1} parent=11 // pred_check
        %p371 = pneg %p297
      $region58: #{transformer_forward.1} parent=11 // pred_check_branch
        %373 = sbr.rel (%p371) target = $region60
      $region59: #{transformer_forward.1} parent=11 // pred_region
        _
      $region60: #{transformer_forward.1} parent=11 // pred_fallthru
        _
    $region12: #{transformer_forward.1} parent=5 // pred_fallthru
      _
    %p374 = scmp.lt.s32.totalorder %s19, 2
    // Predicated region
    $region61: #{transformer_forward.1} parent=5 // pred_check
      %p375 = pneg %p374
    $region62: #{transformer_forward.1} parent=5 // pred_check_branch
      %377 = sbr.rel (%p375) target = $region64
    $region63: #{transformer_forward.1} parent=5 // pred_region
      // Predicated region
      $region65: #{transformer_forward.1} parent=63 // pred_check
        %p378 = pneg %p39
      $region66: #{transformer_forward.1} parent=63 // pred_check_branch
        %380 = sbr.rel (%p378) target = $region68
      $region67: #{transformer_forward.1} parent=63 // pred_region
        %p381 = scmp.lt.s32.totalorder %s19, 1
        %s382 = scalar_select %p381, %s19, 1
        %s383 = smul.addr %s382, 4
        %s384 = smul.addr %s383, 8
        %s385 = scalar_lea.vmem %s0, %s384
      $region68: #{transformer_forward.1} parent=63 // pred_fallthru
        _
    $region64: #{transformer_forward.1} parent=5 // pred_fallthru
      _
    %p386 = scmp.le.s32.totalorder 1, %s19
    %p387 = scmp.lt.s32.totalorder %s19, 3
    %p388 = pnand %p386, %p387
    %p389 = pneg %p388
    // Predicated region
    $region69: #{transformer_forward.1} parent=5 // pred_check
      _
    $region70: #{transformer_forward.1} parent=5 // pred_check_branch
      %391 = sbr.rel (%p388) target = $region72
    $region71: #{transformer_forward.1} parent=5 // pred_region
      %s392 = ssub.s32 %s19, 1
      %p393 = scmp.lt.s32.totalorder %s24, 1
      %s394 = scalar_select %p393, %s24, 1
      %s395 = smul.addr %s394, 4
      %s396 = smul.addr %s395, 8
      %s397 = scalar_lea.vmem %s0, %s396
      %p398 = pneg %p45
      %p399 = pneg %p42
      %p400 = pneg %p66
      %p401 = pneg %p63
      %p402 = pneg %p87
      %p403 = pneg %p84
      %p404 = pneg %p108
      %p405 = pneg %p105
      %p406 = pneg %p129
      %p407 = pneg %p126
      %p408 = pneg %p150
      %p409 = pneg %p147
      %p410 = pneg %p171
      %p411 = pneg %p168
      %p412 = pneg %p192
      %p413 = pneg %p189
      %p414 = pneg %p213
      %p415 = pneg %p210
      %p416 = pneg %p234
      %p417 = pneg %p231
      %p418 = pneg %p255
      %p419 = pneg %p252
      %p420 = pneg %p276
      %p421 = pneg %p273
      %p422 = pneg %p297
      %p423 = pneg %p294
      %p424 = pneg %p323
      %p425 = pneg %p320
      %p426 = scmp.lt.s32.totalorder %s24, 1
      %s427 = scalar_select %p426, %s24, 1
      %s428 = smul.addr %s427, 4
      %s429 = smul.addr %s428, 8
      %s430 = scalar_lea.vmem %s13, %s429
      %p431 = scmp.lt.s32.totalorder %s24, 1
      %s432 = scalar_select %p431, %s24, 1
      %s433 = smul.addr %s432, 4
      %s434 = smul.addr %s433, 8
      %s435 = scalar_lea.vmem %s0, %s434
      %p436 = scmp.lt.s32.totalorder %s24, 1
      %s437 = scalar_select %p436, %s24, 1
      %s438 = smul.addr %s437, 4
      %s439 = smul.addr %s438, 8
      %s440 = scalar_lea.vmem %s13, %s439
      %v442 = vld [vmem:[%s435] sm:$0xff]
      %v443 = vld [vmem:[%s435 + $0x8] sm:$0xff]
      %v444 = vld [vmem:[%s435 + $0x10] sm:$0xff]
      %v445 = vld [vmem:[%s435 + $0x18] sm:$0xff]
      %446 = vxpose.xlu0.b32.start [1/16] %v442, 128
      %447 = vxpose.xlu0.b32.cont [2/16] %v443, 128
      %448 = vxpose.xlu0.b32.cont [3/16] %v444, 128
      %449 = vxpose.xlu0.b32.cont [4/16] %v445, 128
      %450 = vxpose.xlu0.b32.cont [5/16] 0.0, 128
      %451 = vxpose.xlu0.b32.cont [6/16] 0.0, 128
      %452 = vxpose.xlu0.b32.cont [7/16] 0.0, 128
      %453 = vxpose.xlu0.b32.cont [8/16] 0.0, 128
      %454 = vxpose.xlu0.b32.cont [9/16] 0.0, 128
      %455 = vxpose.xlu0.b32.cont [10/16] 0.0, 128
      %456 = vxpose.xlu0.b32.cont [11/16] 0.0, 128
      %457 = vxpose.xlu0.b32.cont [12/16] 0.0, 128
      %458 = vxpose.xlu0.b32.cont [13/16] 0.0, 128
      %459 = vxpose.xlu0.b32.cont [14/16] 0.0, 128
      %460 = vxpose.xlu0.b32.cont [15/16] 0.0, 128
      %461 = vxpose.xlu0.b32.end [16/16] 0.0, 128
      %v462 = vpop.trf.xlu0
      %v463 = vpop.trf.xlu0
      %v464 = vpop.trf.xlu0
      %v465 = vpop.trf.xlu0
      %v466 = vpop.trf.xlu0
      %v467 = vpop.trf.xlu0
      %v468 = vpop.trf.xlu0
      %v469 = vpop.trf.xlu0
      %v470 = vpop.trf.xlu0
      %v471 = vpop.trf.xlu0
      %v472 = vpop.trf.xlu0
      %v473 = vpop.trf.xlu0
      %v474 = vpop.trf.xlu0
      %v475 = vpop.trf.xlu0
      %v476 = vpop.trf.xlu0
      %v477 = vpop.trf.xlu0
      %v478 = vld [vmem:[%s1] sm:$0x1]
      %v479 = vld [vmem:[%s2] sm:$0x1]
      %vm480 = vcmask 261120
      %v481 = vsel %vm480, %v462, 0.0
      %482 = vadd.xlane.f32.xlu0 %v481
      %v483 = vpop.xlane.xlu0 %482
      %v484 = vsel %vm480, %v463, 0.0
      %485 = vadd.xlane.f32.xlu0 %v484
      %v486 = vpop.xlane.xlu0 %485
      %v487 = vrcp.pop 32.0
      %v488 = vmul.f32 32.0, %v487
      %v489 = vsub.f32 1.0, %v488
      %v490 = vmul.f32 %v487, %v489
      %v491 = vadd.f32 %v487, %v490
      %vm492 = vweird.f32 %v487
      %v493 = vsel %vm492, %v487, %v491
      %v494 = vmul.f32 %v483, %v493
      %v495 = vmul.f32 %v486, %v493
      %v496 = vsub.f32 %v462, %v494
      %v497 = vsub.f32 %v463, %v495
      %v498 = vmul.f32 %v496, %v496
      %v499 = vmul.f32 %v497, %v497
      %v500 = vsel %vm480, %v498, 0.0
      %501 = vadd.xlane.f32.xlu0 %v500
      %v502 = vpop.xlane.xlu0 %501
      %v503 = vsel %vm480, %v499, 0.0
      %504 = vadd.xlane.f32.xlu0 %v503
      %v505 = vpop.xlane.xlu0 %504
      %v506 = vmul.f32 %v502, %v493
      %v507 = vmul.f32 %v505, %v493
      %v508 = vadd.f32 %v506, 1e-05
      %v509 = vadd.f32 %v507, 1e-05
      %v510 = vrsqrt.pop %v508
      %v511 = vmul.f32 %v510, %v508
      %v512 = vmul.f32 %v511, %v510
      %v513 = vmul.f32 0.5, %v512
      %v514 = vsub.f32 1.5, %v513
      %v515 = vmul.f32 %v510, %v514
      %vm516 = vweird.f32 %v508
      %vm517 = vweird.f32 %v510
      %vm518 = vmor %vm516, %vm517
      %v519 = vsel %vm518, %v510, %v515
      %v520 = vrsqrt.pop %v509
      %v521 = vmul.f32 %v520, %v509
      %v522 = vmul.f32 %v521, %v520
      %v523 = vmul.f32 0.5, %v522
      %v524 = vsub.f32 1.5, %v523
      %v525 = vmul.f32 %v520, %v524
      %vm526 = vweird.f32 %v509
      %vm527 = vweird.f32 %v520
      %vm528 = vmor %vm526, %vm527
      %v529 = vsel %vm528, %v520, %v525
      %v530 = vmul.f32 %v496, %v519
      %v531 = vmul.f32 %v497, %v529
      %v533 = vperm.slane %v478, 0
      %v535 = vmul.f32 %v530, %v533
      %v536 = vmul.f32 %v531, %v533
      %v538 = vperm.slane %v479, 0
      %v540 = vadd.f32 %v535, %v538
      %v541 = vadd.f32 %v536, %v538
      %v542 = vpack.c.bf16 %v541, %v540
      %v543 = vld [vmem:[%s3] sm:$0xff]
      %v544 = vld [vmem:[%s3 + $0x8] sm:$0xff]
      %v545 = vld [vmem:[%s3 + $0x10] sm:$0xff]
      %v546 = vld [vmem:[%s3 + $0x18] sm:$0xff]
      %v547 = vld [vmem:[%s3 + $0x20] sm:$0xff]
      %v548 = vld [vmem:[%s3 + $0x28] sm:$0xff]
      %v549 = vld [vmem:[%s3 + $0x30] sm:$0xff]
      %v550 = vld [vmem:[%s3 + $0x38] sm:$0xff]
      %v551 = vld [vmem:[%s3 + $0x40] sm:$0xff]
      %v552 = vld [vmem:[%s3 + $0x48] sm:$0xff]
      %v553 = vld [vmem:[%s3 + $0x50] sm:$0xff]
      %v554 = vld [vmem:[%s3 + $0x58] sm:$0xff]
      %v567 = vunpack.c.l.b16 %v543
      %v568 = vunpack.c.h.b16 %v543
      %v569 = vunpack.c.l.b16 %v544
      %v570 = vunpack.c.h.b16 %v544
      %v571 = vunpack.c.l.b16 %v545
      %v572 = vunpack.c.h.b16 %v545
      %v573 = vunpack.c.l.b16 %v546
      %v574 = vunpack.c.h.b16 %v546
      %v575 = vunpack.c.l.b16 %v547
      %v576 = vunpack.c.h.b16 %v547
      %v577 = vunpack.c.l.b16 %v548
      %v578 = vunpack.c.h.b16 %v548
      %v579 = vunpack.c.l.b16 %v549
      %v580 = vunpack.c.h.b16 %v549
      %v581 = vunpack.c.l.b16 %v550
      %v582 = vunpack.c.h.b16 %v550
      %v583 = vunpack.c.l.b16 %v551
      %v584 = vunpack.c.h.b16 %v551
      %v585 = vunpack.c.l.b16 %v552
      %v586 = vunpack.c.h.b16 %v552
      %v587 = vunpack.c.l.b16 %v553
      %v588 = vunpack.c.h.b16 %v553
      %v589 = vunpack.c.l.b16 %v554
      %v590 = vunpack.c.h.b16 %v554
      %v591 = vpack.c.b16 %v573, %v567
      %v592 = vpack.c.b16 %v574, %v568
      %v593 = vpack.c.b16 %v575, %v569
      %v594 = vpack.c.b16 %v576, %v570
      %v595 = vpack.c.b16 %v577, %v571
      %v596 = vpack.c.b16 %v578, %v572
      %v597 = vpack.c.b16 %v585, %v579
      %v598 = vpack.c.b16 %v586, %v580
      %v599 = vpack.c.b16 %v587, %v581
      %v600 = vpack.c.b16 %v588, %v582
      %v601 = vpack.c.b16 %v589, %v583
      %v602 = vpack.c.b16 %v590, %v584
      %v616 = vsel %vm480, %v542, 0
      %618 = vmatpush.bf16.msra.mxu0 0
      %619 = vmatpush.bf16.msra.mxu0 0
      %620 = vmatpush.bf16.msra.mxu0 0
      %621 = vmatpush.bf16.msra.mxu0 0
      %622 = vmatpush.bf16.msra.mxu0 0
      %623 = vmatpush.bf16.msra.mxu0 0
      %624 = vmatpush.bf16.msra.mxu0 %v597
      %625 = vmatpush.bf16.msra.mxu0 %v591
      %626 = vmatmul.bf16.gmra.mxu0 %v616
      %v627 = vpop.f32.mrf.mxu0
      %v628 = vadd.f32 0.0, %v627
      %v629 = vpop.f32.mrf.mxu0
      %v630 = vadd.f32 0.0, %v629
      %631 = vdwg.mxu0
      %632 = vmatpush.bf16.msra.mxu0 0
      %633 = vmatpush.bf16.msra.mxu0 0
      %634 = vmatpush.bf16.msra.mxu0 0
      %635 = vmatpush.bf16.msra.mxu0 0
      %636 = vmatpush.bf16.msra.mxu0 0
      %637 = vmatpush.bf16.msra.mxu0 0
      %638 = vmatpush.bf16.msra.mxu0 %v598
      %639 = vmatpush.bf16.msra.mxu0 %v592
      %640 = vmatmul.bf16.gmra.mxu0 %v616
      %v641 = vpop.f32.mrf.mxu0
      %v642 = vadd.f32 0.0, %v641
      %v643 = vpop.f32.mrf.mxu0
      %v644 = vadd.f32 0.0, %v643
      %645 = vdwg.mxu0
      %646 = vmatpush.bf16.msra.mxu0 0
      %647 = vmatpush.bf16.msra.mxu0 0
      %648 = vmatpush.bf16.msra.mxu0 0
      %649 = vmatpush.bf16.msra.mxu0 0
      %650 = vmatpush.bf16.msra.mxu0 0
      %651 = vmatpush.bf16.msra.mxu0 0
      %652 = vmatpush.bf16.msra.mxu0 %v599
      %653 = vmatpush.bf16.msra.mxu0 %v593
      %654 = vmatmul.bf16.gmra.mxu0 %v616
      %v655 = vpop.f32.mrf.mxu0
      %v656 = vadd.f32 0.0, %v655
      %v657 = vpop.f32.mrf.mxu0
      %v658 = vadd.f32 0.0, %v657
      %659 = vdwg.mxu0
      %660 = vmatpush.bf16.msra.mxu0 0
      %661 = vmatpush.bf16.msra.mxu0 0
      %662 = vmatpush.bf16.msra.mxu0 0
      %663 = vmatpush.bf16.msra.mxu0 0
      %664 = vmatpush.bf16.msra.mxu0 0
      %665 = vmatpush.bf16.msra.mxu0 0
      %666 = vmatpush.bf16.msra.mxu0 %v600
      %667 = vmatpush.bf16.msra.mxu0 %v594
      %668 = vmatmul.bf16.gmra.mxu0 %v616
      %v669 = vpop.f32.mrf.mxu0
      %v670 = vadd.f32 0.0, %v669
      %v671 = vpop.f32.mrf.mxu0
      %v672 = vadd.f32 0.0, %v671
      %673 = vdwg.mxu0
      %674 = vmatpush.bf16.msra.mxu0 0
      %675 = vmatpush.bf16.msra.mxu0 0
      %676 = vmatpush.bf16.msra.mxu0 0
      %677 = vmatpush.bf16.msra.mxu0 0
      %678 = vmatpush.bf16.msra.mxu0 0
      %679 = vmatpush.bf16.msra.mxu0 0
      %680 = vmatpush.bf16.msra.mxu0 %v601
      %681 = vmatpush.bf16.msra.mxu0 %v595
      %682 = vmatmul.bf16.gmra.mxu0 %v616
      %v683 = vpop.f32.mrf.mxu0
      %v684 = vadd.f32 0.0, %v683
      %v685 = vpop.f32.mrf.mxu0
      %v686 = vadd.f32 0.0, %v685
      %687 = vdwg.mxu0
      %688 = vmatpush.bf16.msra.mxu0 0
      %689 = vmatpush.bf16.msra.mxu0 0
      %690 = vmatpush.bf16.msra.mxu0 0
      %691 = vmatpush.bf16.msra.mxu0 0
      %692 = vmatpush.bf16.msra.mxu0 0
      %693 = vmatpush.bf16.msra.mxu0 0
      %694 = vmatpush.bf16.msra.mxu0 %v602
      %695 = vmatpush.bf16.msra.mxu0 %v596
      %696 = vmatmul.bf16.gmra.mxu0 %v616
      %v697 = vpop.f32.mrf.mxu0
      %v698 = vadd.f32 0.0, %v697
      %v699 = vpop.f32.mrf.mxu0
      %v700 = vadd.f32 0.0, %v699
      %701 = vdwg.mxu0
      %v702 = vpack.c.bf16 %v642, %v628
      %v703 = vpack.c.bf16 %v644, %v630
      %v704 = vpack.c.bf16 %v670, %v656
      %v705 = vpack.c.bf16 %v672, %v658
      %v706 = vpack.c.bf16 %v698, %v684
      %v707 = vpack.c.bf16 %v700, %v686
      %v708 = vld [vmem:[%s6] sm:$0xf]
      %v709 = vld [vmem:[%s6 + $0x4] sm:$0xf]
      %v710 = vunpack.c.l.bf16 %v708
      %v711 = vunpack.c.l.bf16 %v709
      %v714 = vunpack.c.l.b16 %v702
      %v715 = vunpack.c.l.b16 %v703
      %v716 = vpack.c.b16 %v715, %v714
      %v719 = vunpack.c.l.b16 %v704
      %v720 = vunpack.c.l.b16 %v705
      %v721 = vpack.c.b16 %v720, %v719
      %v723 = vsel %vm480, %v716, 0
      %v726 = vsel %vm480, %v721, 0
      %728 = vmatpush.bf16.xpose.msra.mxu0 0
      %729 = vmatpush.bf16.xpose.msra.mxu0 0
      %730 = vmatpush.bf16.xpose.msra.mxu0 0
      %731 = vmatpush.bf16.xpose.msra.mxu0 0
      %732 = vmatpush.bf16.xpose.msra.mxu0 0
      %733 = vmatpush.bf16.xpose.msra.mxu0 0
      %734 = vmatpush.bf16.xpose.msra.mxu0 0
      %735 = vmatpush.bf16.xpose.msra.mxu0 %v726
      %736 = vmatmul.bf16.gmra.mxu0 %v723
      %v737 = vpop.f32.mrf.mxu0
      %v738 = vadd.f32 %v710, %v737
      %v739 = vpop.f32.mrf.mxu0
      %v740 = vadd.f32 %v711, %v739
      %741 = vdwg.mxu0
      %vm742 = vcmask 130048
      %v743 = vsel %vm742, %v738, -inf
      %744 = vmax.xlane.f32.xlu0 %v743
      %v745 = vpop.xlane.xlu0 %744
      %v746 = vsel %vm742, %v740, -inf
      %747 = vmax.xlane.f32.xlu0 %v746
      %v748 = vpop.xlane.xlu0 %747
      %v749 = vsub.f32 %v738, %v745
      %v750 = vsub.f32 %v740, %v748
      %v751 = vmul.f32 %v749, 1.442695
      %v752 = vpow.pop %v751
      %v753 = vmul.f32 %v750, 1.442695
      %v754 = vpow.pop %v753
      %v755 = vsel %vm742, %v752, 0.0
      %756 = vadd.xlane.f32.xlu0 %v755
      %v757 = vpop.xlane.xlu0 %756
      %v758 = vsel %vm742, %v754, 0.0
      %759 = vadd.xlane.f32.xlu0 %v758
      %v760 = vpop.xlane.xlu0 %759
      %v761 = vrcp.pop %v757
      %v762 = vrcp.pop %v760
      %v763 = vmul.f32 %v752, %v761
      %v764 = vmul.f32 %v754, %v762
      %v765 = vpack.c.bf16 %v764, %v763
      %v768 = vunpack.c.l.b16 %v706
      %v769 = vunpack.c.l.b16 %v707
      %v770 = vpack.c.b16 %v769, %v768
      %v773 = vsel %vm742, %v765, 0
      %775 = vmatpush.bf16.msra.mxu0 0
      %776 = vmatpush.bf16.msra.mxu0 0
      %777 = vmatpush.bf16.msra.mxu0 0
      %778 = vmatpush.bf16.msra.mxu0 0
      %779 = vmatpush.bf16.msra.mxu0 0
      %780 = vmatpush.bf16.msra.mxu0 0
      %781 = vmatpush.bf16.msra.mxu0 0
      %782 = vmatpush.bf16.msra.mxu0 %v770
      %783 = vmatmul.bf16.gmra.mxu0 %v773
      %v784 = vpop.f32.mrf.mxu0
      %v785 = vadd.f32 0.0, %v784
      %v786 = vpop.f32.mrf.mxu0
      %v787 = vadd.f32 0.0, %v786
      %788 = vdwg.mxu0
      %s789 = scalar_lea.vmem %s6, 8
      %v790 = vld [vmem:[%s789] sm:$0xf]
      %v791 = vld [vmem:[%s789 + $0x4] sm:$0xf]
      %v792 = vunpack.c.l.bf16 %v790
      %v793 = vunpack.c.l.bf16 %v791
      %794 = vrot.lane.b32.xlu0 %v716, 96
      %v795 = vpop.permute.xlu0 %794
      %796 = vrot.lane.b32.xlu0 %v721, 96
      %v797 = vpop.permute.xlu0 %796
      %v799 = vsel %vm480, %v795, 0
      %v802 = vsel %vm480, %v797, 0
      %804 = vmatpush.bf16.xpose.msra.mxu0 0
      %805 = vmatpush.bf16.xpose.msra.mxu0 0
      %806 = vmatpush.bf16.xpose.msra.mxu0 0
      %807 = vmatpush.bf16.xpose.msra.mxu0 0
      %808 = vmatpush.bf16.xpose.msra.mxu0 0
      %809 = vmatpush.bf16.xpose.msra.mxu0 0
      %810 = vmatpush.bf16.xpose.msra.mxu0 0
      %811 = vmatpush.bf16.xpose.msra.mxu0 %v802
      %812 = vmatmul.bf16.gmra.mxu0 %v799
      %v813 = vpop.f32.mrf.mxu0
      %v814 = vadd.f32 %v792, %v813
      %v815 = vpop.f32.mrf.mxu0
      %v816 = vadd.f32 %v793, %v815
      %817 = vdwg.mxu0
      %v818 = vsel %vm742, %v814, -inf
      %819 = vmax.xlane.f32.xlu0 %v818
      %v820 = vpop.xlane.xlu0 %819
      %v821 = vsel %vm742, %v816, -inf
      %822 = vmax.xlane.f32.xlu0 %v821
      %v823 = vpop.xlane.xlu0 %822
      %v824 = vsub.f32 %v814, %v820
      %v825 = vsub.f32 %v816, %v823
      %v826 = vmul.f32 %v824, 1.442695
      %v827 = vpow.pop %v826
      %v828 = vmul.f32 %v825, 1.442695
      %v829 = vpow.pop %v828
      %v830 = vsel %vm742, %v827, 0.0
      %831 = vadd.xlane.f32.xlu0 %v830
      %v832 = vpop.xlane.xlu0 %831
      %v833 = vsel %vm742, %v829, 0.0
      %834 = vadd.xlane.f32.xlu0 %v833
      %v835 = vpop.xlane.xlu0 %834
      %v836 = vrcp.pop %v832
      %v837 = vrcp.pop %v835
      %v838 = vmul.f32 %v827, %v836
      %v839 = vmul.f32 %v829, %v837
      %v840 = vpack.c.bf16 %v839, %v838
      %841 = vrot.lane.b32.xlu0 %v770, 96
      %v842 = vpop.permute.xlu0 %841
      %v845 = vsel %vm742, %v840, 0
      %847 = vmatpush.bf16.msra.mxu0 0
      %848 = vmatpush.bf16.msra.mxu0 0
      %849 = vmatpush.bf16.msra.mxu0 0
      %850 = vmatpush.bf16.msra.mxu0 0
      %851 = vmatpush.bf16.msra.mxu0 0
      %852 = vmatpush.bf16.msra.mxu0 0
      %853 = vmatpush.bf16.msra.mxu0 0
      %854 = vmatpush.bf16.msra.mxu0 %v842
      %855 = vmatmul.bf16.gmra.mxu0 %v845
      %v856 = vpop.f32.mrf.mxu0
      %v857 = vadd.f32 0.0, %v856
      %v858 = vpop.f32.mrf.mxu0
      %v859 = vadd.f32 0.0, %v858
      %860 = vdwg.mxu0
      %s861 = scalar_lea.vmem %s6, 16
      %v862 = vld [vmem:[%s861] sm:$0xf]
      %v863 = vld [vmem:[%s861 + $0x4] sm:$0xf]
      %v864 = vunpack.c.l.bf16 %v862
      %v865 = vunpack.c.l.bf16 %v863
      %866 = vrot.lane.b32.xlu0 %v716, 64
      %v867 = vpop.permute.xlu0 %866
      %868 = vrot.lane.b32.xlu0 %v721, 64
      %v869 = vpop.permute.xlu0 %868
      %v871 = vsel %vm480, %v867, 0
      %v874 = vsel %vm480, %v869, 0
      %876 = vmatpush.bf16.xpose.msra.mxu0 0
      %877 = vmatpush.bf16.xpose.msra.mxu0 0
      %878 = vmatpush.bf16.xpose.msra.mxu0 0
      %879 = vmatpush.bf16.xpose.msra.mxu0 0
      %880 = vmatpush.bf16.xpose.msra.mxu0 0
      %881 = vmatpush.bf16.xpose.msra.mxu0 0
      %882 = vmatpush.bf16.xpose.msra.mxu0 0
      %883 = vmatpush.bf16.xpose.msra.mxu0 %v874
      %884 = vmatmul.bf16.gmra.mxu0 %v871
      %v885 = vpop.f32.mrf.mxu0
      %v886 = vadd.f32 %v864, %v885
      %v887 = vpop.f32.mrf.mxu0
      %v888 = vadd.f32 %v865, %v887
      %889 = vdwg.mxu0
      %v890 = vsel %vm742, %v886, -inf
      %891 = vmax.xlane.f32.xlu0 %v890
      %v892 = vpop.xlane.xlu0 %891
      %v893 = vsel %vm742, %v888, -inf
      %894 = vmax.xlane.f32.xlu0 %v893
      %v895 = vpop.xlane.xlu0 %894
      %v896 = vsub.f32 %v886, %v892
      %v897 = vsub.f32 %v888, %v895
      %v898 = vmul.f32 %v896, 1.442695
      %v899 = vpow.pop %v898
      %v900 = vmul.f32 %v897, 1.442695
      %v901 = vpow.pop %v900
      %v902 = vsel %vm742, %v899, 0.0
      %903 = vadd.xlane.f32.xlu0 %v902
      %v904 = vpop.xlane.xlu0 %903
      %v905 = vsel %vm742, %v901, 0.0
      %906 = vadd.xlane.f32.xlu0 %v905
      %v907 = vpop.xlane.xlu0 %906
      %v908 = vrcp.pop %v904
      %v909 = vrcp.pop %v907
      %v910 = vmul.f32 %v899, %v908
      %v911 = vmul.f32 %v901, %v909
      %v912 = vpack.c.bf16 %v911, %v910
      %913 = vrot.lane.b32.xlu0 %v770, 64
      %v914 = vpop.permute.xlu0 %913
      %v917 = vsel %vm742, %v912, 0
      %919 = vmatpush.bf16.msra.mxu0 0
      %920 = vmatpush.bf16.msra.mxu0 0
      %921 = vmatpush.bf16.msra.mxu0 0
      %922 = vmatpush.bf16.msra.mxu0 0
      %923 = vmatpush.bf16.msra.mxu0 0
      %924 = vmatpush.bf16.msra.mxu0 0
      %925 = vmatpush.bf16.msra.mxu0 0
      %926 = vmatpush.bf16.msra.mxu0 %v914
      %927 = vmatmul.bf16.gmra.mxu0 %v917
      %v928 = vpop.f32.mrf.mxu0
      %v929 = vadd.f32 0.0, %v928
      %v930 = vpop.f32.mrf.mxu0
      %v931 = vadd.f32 0.0, %v930
      %932 = vdwg.mxu0
      %s933 = scalar_lea.vmem %s6, 24
      %v934 = vld [vmem:[%s933] sm:$0xf]
      %v935 = vld [vmem:[%s933 + $0x4] sm:$0xf]
      %v936 = vunpack.c.l.bf16 %v934
      %v937 = vunpack.c.l.bf16 %v935
      %938 = vrot.lane.b32.xlu0 %v716, 32
      %v939 = vpop.permute.xlu0 %938
      %940 = vrot.lane.b32.xlu0 %v721, 32
      %v941 = vpop.permute.xlu0 %940
      %v943 = vsel %vm480, %v939, 0
      %v946 = vsel %vm480, %v941, 0
      %948 = vmatpush.bf16.xpose.msra.mxu0 0
      %949 = vmatpush.bf16.xpose.msra.mxu0 0
      %950 = vmatpush.bf16.xpose.msra.mxu0 0
      %951 = vmatpush.bf16.xpose.msra.mxu0 0
      %952 = vmatpush.bf16.xpose.msra.mxu0 0
      %953 = vmatpush.bf16.xpose.msra.mxu0 0
      %954 = vmatpush.bf16.xpose.msra.mxu0 0
      %955 = vmatpush.bf16.xpose.msra.mxu0 %v946
      %956 = vmatmul.bf16.gmra.mxu0 %v943
      %v957 = vpop.f32.mrf.mxu0
      %v958 = vadd.f32 %v936, %v957
      %v959 = vpop.f32.mrf.mxu0
      %v960 = vadd.f32 %v937, %v959
      %961 = vdwg.mxu0
      %v962 = vsel %vm742, %v958, -inf
      %963 = vmax.xlane.f32.xlu0 %v962
      %v964 = vpop.xlane.xlu0 %963
      %v965 = vsel %vm742, %v960, -inf
      %966 = vmax.xlane.f32.xlu0 %v965
      %v967 = vpop.xlane.xlu0 %966
      %v968 = vsub.f32 %v958, %v964
      %v969 = vsub.f32 %v960, %v967
      %v970 = vmul.f32 %v968, 1.442695
      %v971 = vpow.pop %v970
      %v972 = vmul.f32 %v969, 1.442695
      %v973 = vpow.pop %v972
      %v974 = vsel %vm742, %v971, 0.0
      %975 = vadd.xlane.f32.xlu0 %v974
      %v976 = vpop.xlane.xlu0 %975
      %v977 = vsel %vm742, %v973, 0.0
      %978 = vadd.xlane.f32.xlu0 %v977
      %v979 = vpop.xlane.xlu0 %978
      %v980 = vrcp.pop %v976
      %v981 = vrcp.pop %v979
      %v982 = vmul.f32 %v971, %v980
      %v983 = vmul.f32 %v973, %v981
      %v984 = vpack.c.bf16 %v983, %v982
      %985 = vrot.lane.b32.xlu0 %v770, 32
      %v986 = vpop.permute.xlu0 %985
      %v989 = vsel %vm742, %v984, 0
      %991 = vmatpush.bf16.msra.mxu0 0
      %992 = vmatpush.bf16.msra.mxu0 0
      %993 = vmatpush.bf16.msra.mxu0 0
      %994 = vmatpush.bf16.msra.mxu0 0
      %995 = vmatpush.bf16.msra.mxu0 0
      %996 = vmatpush.bf16.msra.mxu0 0
      %997 = vmatpush.bf16.msra.mxu0 0
      %998 = vmatpush.bf16.msra.mxu0 %v986
      %999 = vmatmul.bf16.gmra.mxu0 %v989
      %v1000 = vpop.f32.mrf.mxu0
      %v1001 = vadd.f32 0.0, %v1000
      %v1002 = vpop.f32.mrf.mxu0
      %v1003 = vadd.f32 0.0, %v1002
      %1004 = vdwg.mxu0
      %s1005 = scalar_lea.vmem %s6, 32
      %v1006 = vld [vmem:[%s1005] sm:$0xf]
      %v1007 = vld [vmem:[%s1005 + $0x4] sm:$0xf]
      %v1008 = vunpack.c.l.bf16 %v1006
      %v1009 = vunpack.c.l.bf16 %v1007
      %v1010 = vunpack.c.h.b16 %v702
      %v1011 = vunpack.c.h.b16 %v703
      %v1012 = vpack.c.b16 %v1011, %v1010
      %v1013 = vunpack.c.h.b16 %v704
      %v1014 = vunpack.c.h.b16 %v705
      %v1015 = vpack.c.b16 %v1014, %v1013
      %v1017 = vsel %vm480, %v1012, 0
      %v1020 = vsel %vm480, %v1015, 0
      %1022 = vmatpush.bf16.xpose.msra.mxu0 0
      %1023 = vmatpush.bf16.xpose.msra.mxu0 0
      %1024 = vmatpush.bf16.xpose.msra.mxu0 0
      %1025 = vmatpush.bf16.xpose.msra.mxu0 0
      %1026 = vmatpush.bf16.xpose.msra.mxu0 0
      %1027 = vmatpush.bf16.xpose.msra.mxu0 0
      %1028 = vmatpush.bf16.xpose.msra.mxu0 0
      %1029 = vmatpush.bf16.xpose.msra.mxu0 %v1020
      %1030 = vmatmul.bf16.gmra.mxu0 %v1017
      %v1031 = vpop.f32.mrf.mxu0
      %v1032 = vadd.f32 %v1008, %v1031
      %v1033 = vpop.f32.mrf.mxu0
      %v1034 = vadd.f32 %v1009, %v1033
      %1035 = vdwg.mxu0
      %v1036 = vsel %vm742, %v1032, -inf
      %1037 = vmax.xlane.f32.xlu0 %v1036
      %v1038 = vpop.xlane.xlu0 %1037
      %v1039 = vsel %vm742, %v1034, -inf
      %1040 = vmax.xlane.f32.xlu0 %v1039
      %v1041 = vpop.xlane.xlu0 %1040
      %v1042 = vsub.f32 %v1032, %v1038
      %v1043 = vsub.f32 %v1034, %v1041
      %v1044 = vmul.f32 %v1042, 1.442695
      %v1045 = vpow.pop %v1044
      %v1046 = vmul.f32 %v1043, 1.442695
      %v1047 = vpow.pop %v1046
      %v1048 = vsel %vm742, %v1045, 0.0
      %1049 = vadd.xlane.f32.xlu0 %v1048
      %v1050 = vpop.xlane.xlu0 %1049
      %v1051 = vsel %vm742, %v1047, 0.0
      %1052 = vadd.xlane.f32.xlu0 %v1051
      %v1053 = vpop.xlane.xlu0 %1052
      %v1054 = vrcp.pop %v1050
      %v1055 = vrcp.pop %v1053
      %v1056 = vmul.f32 %v1045, %v1054
      %v1057 = vmul.f32 %v1047, %v1055
      %v1058 = vpack.c.bf16 %v1057, %v1056
      %v1059 = vunpack.c.h.b16 %v706
      %v1060 = vunpack.c.h.b16 %v707
      %v1061 = vpack.c.b16 %v1060, %v1059
      %v1064 = vsel %vm742, %v1058, 0
      %1066 = vmatpush.bf16.msra.mxu0 0
      %1067 = vmatpush.bf16.msra.mxu0 0
      %1068 = vmatpush.bf16.msra.mxu0 0
      %1069 = vmatpush.bf16.msra.mxu0 0
      %1070 = vmatpush.bf16.msra.mxu0 0
      %1071 = vmatpush.bf16.msra.mxu0 0
      %1072 = vmatpush.bf16.msra.mxu0 0
      %1073 = vmatpush.bf16.msra.mxu0 %v1061
      %1074 = vmatmul.bf16.gmra.mxu0 %v1064
      %v1075 = vpop.f32.mrf.mxu0
      %v1076 = vadd.f32 0.0, %v1075
      %v1077 = vpop.f32.mrf.mxu0
      %v1078 = vadd.f32 0.0, %v1077
      %1079 = vdwg.mxu0
      %s1080 = scalar_lea.vmem %s6, 40
      %v1081 = vld [vmem:[%s1080] sm:$0xf]
      %v1082 = vld [vmem:[%s1080 + $0x4] sm:$0xf]
      %v1083 = vunpack.c.l.bf16 %v1081
      %v1084 = vunpack.c.l.bf16 %v1082
      %1085 = vrot.lane.b32.xlu0 %v1012, 96
      %v1086 = vpop.permute.xlu0 %1085
      %1087 = vrot.lane.b32.xlu0 %v1015, 96
      %v1088 = vpop.permute.xlu0 %1087
      %v1090 = vsel %vm480, %v1086, 0
      %v1093 = vsel %vm480, %v1088, 0
      %1095 = vmatpush.bf16.xpose.msra.mxu0 0
      %1096 = vmatpush.bf16.xpose.msra.mxu0 0
      %1097 = vmatpush.bf16.xpose.msra.mxu0 0
      %1098 = vmatpush.bf16.xpose.msra.mxu0 0
      %1099 = vmatpush.bf16.xpose.msra.mxu0 0
      %1100 = vmatpush.bf16.xpose.msra.mxu0 0
      %1101 = vmatpush.bf16.xpose.msra.mxu0 0
      %1102 = vmatpush.bf16.xpose.msra.mxu0 %v1093
      %1103 = vmatmul.bf16.gmra.mxu0 %v1090
      %v1104 = vpop.f32.mrf.mxu0
      %v1105 = vadd.f32 %v1083, %v1104
      %v1106 = vpop.f32.mrf.mxu0
      %v1107 = vadd.f32 %v1084, %v1106
      %1108 = vdwg.mxu0
      %v1109 = vsel %vm742, %v1105, -inf
      %1110 = vmax.xlane.f32.xlu0 %v1109
      %v1111 = vpop.xlane.xlu0 %1110
      %v1112 = vsel %vm742, %v1107, -inf
      %1113 = vmax.xlane.f32.xlu0 %v1112
      %v1114 = vpop.xlane.xlu0 %1113
      %v1115 = vsub.f32 %v1105, %v1111
      %v1116 = vsub.f32 %v1107, %v1114
      %v1117 = vmul.f32 %v1115, 1.442695
      %v1118 = vpow.pop %v1117
      %v1119 = vmul.f32 %v1116, 1.442695
      %v1120 = vpow.pop %v1119
      %v1121 = vsel %vm742, %v1118, 0.0
      %1122 = vadd.xlane.f32.xlu0 %v1121
      %v1123 = vpop.xlane.xlu0 %1122
      %v1124 = vsel %vm742, %v1120, 0.0
      %1125 = vadd.xlane.f32.xlu0 %v1124
      %v1126 = vpop.xlane.xlu0 %1125
      %v1127 = vrcp.pop %v1123
      %v1128 = vrcp.pop %v1126
      %v1129 = vmul.f32 %v1118, %v1127
      %v1130 = vmul.f32 %v1120, %v1128
      %v1131 = vpack.c.bf16 %v1130, %v1129
      %1132 = vrot.lane.b32.xlu0 %v1061, 96
      %v1133 = vpop.permute.xlu0 %1132
      %v1136 = vsel %vm742, %v1131, 0
      %1138 = vmatpush.bf16.msra.mxu0 0
      %1139 = vmatpush.bf16.msra.mxu0 0
      %1140 = vmatpush.bf16.msra.mxu0 0
      %1141 = vmatpush.bf16.msra.mxu0 0
      %1142 = vmatpush.bf16.msra.mxu0 0
      %1143 = vmatpush.bf16.msra.mxu0 0
      %1144 = vmatpush.bf16.msra.mxu0 0
      %1145 = vmatpush.bf16.msra.mxu0 %v1133
      %1146 = vmatmul.bf16.gmra.mxu0 %v1136
      %v1147 = vpop.f32.mrf.mxu0
      %v1148 = vadd.f32 0.0, %v1147
      %v1149 = vpop.f32.mrf.mxu0
      %v1150 = vadd.f32 0.0, %v1149
      %1151 = vdwg.mxu0
      %s1152 = scalar_lea.vmem %s6, 48
      %v1153 = vld [vmem:[%s1152] sm:$0xf]
      %v1154 = vld [vmem:[%s1152 + $0x4] sm:$0xf]
      %v1155 = vunpack.c.l.bf16 %v1153
      %v1156 = vunpack.c.l.bf16 %v1154
      %1157 = vrot.lane.b32.xlu0 %v1012, 64
      %v1158 = vpop.permute.xlu0 %1157
      %1159 = vrot.lane.b32.xlu0 %v1015, 64
      %v1160 = vpop.permute.xlu0 %1159
      %v1162 = vsel %vm480, %v1158, 0
      %v1165 = vsel %vm480, %v1160, 0
      %1167 = vmatpush.bf16.xpose.msra.mxu0 0
      %1168 = vmatpush.bf16.xpose.msra.mxu0 0
      %1169 = vmatpush.bf16.xpose.msra.mxu0 0
      %1170 = vmatpush.bf16.xpose.msra.mxu0 0
      %1171 = vmatpush.bf16.xpose.msra.mxu0 0
      %1172 = vmatpush.bf16.xpose.msra.mxu0 0
      %1173 = vmatpush.bf16.xpose.msra.mxu0 0
      %1174 = vmatpush.bf16.xpose.msra.mxu0 %v1165
      %1175 = vmatmul.bf16.gmra.mxu0 %v1162
      %v1176 = vpop.f32.mrf.mxu0
      %v1177 = vadd.f32 %v1155, %v1176
      %v1178 = vpop.f32.mrf.mxu0
      %v1179 = vadd.f32 %v1156, %v1178
      %1180 = vdwg.mxu0
      %v1181 = vsel %vm742, %v1177, -inf
      %1182 = vmax.xlane.f32.xlu0 %v1181
      %v1183 = vpop.xlane.xlu0 %1182
      %v1184 = vsel %vm742, %v1179, -inf
      %1185 = vmax.xlane.f32.xlu0 %v1184
      %v1186 = vpop.xlane.xlu0 %1185
      %v1187 = vsub.f32 %v1177, %v1183
      %v1188 = vsub.f32 %v1179, %v1186
      %v1189 = vmul.f32 %v1187, 1.442695
      %v1190 = vpow.pop %v1189
      %v1191 = vmul.f32 %v1188, 1.442695
      %v1192 = vpow.pop %v1191
      %v1193 = vsel %vm742, %v1190, 0.0
      %1194 = vadd.xlane.f32.xlu0 %v1193
      %v1195 = vpop.xlane.xlu0 %1194
      %v1196 = vsel %vm742, %v1192, 0.0
      %1197 = vadd.xlane.f32.xlu0 %v1196
      %v1198 = vpop.xlane.xlu0 %1197
      %v1199 = vrcp.pop %v1195
      %v1200 = vrcp.pop %v1198
      %v1201 = vmul.f32 %v1190, %v1199
      %v1202 = vmul.f32 %v1192, %v1200
      %v1203 = vpack.c.bf16 %v1202, %v1201
      %1204 = vrot.lane.b32.xlu0 %v1061, 64
      %v1205 = vpop.permute.xlu0 %1204
      %v1208 = vsel %vm742, %v1203, 0
      %1210 = vmatpush.bf16.msra.mxu0 0
      %1211 = vmatpush.bf16.msra.mxu0 0
      %1212 = vmatpush.bf16.msra.mxu0 0
      %1213 = vmatpush.bf16.msra.mxu0 0
      %1214 = vmatpush.bf16.msra.mxu0 0
      %1215 = vmatpush.bf16.msra.mxu0 0
      %1216 = vmatpush.bf16.msra.mxu0 0
      %1217 = vmatpush.bf16.msra.mxu0 %v1205
      %1218 = vmatmul.bf16.gmra.mxu0 %v1208
      %v1219 = vpop.f32.mrf.mxu0
      %v1220 = vadd.f32 0.0, %v1219
      %v1221 = vpop.f32.mrf.mxu0
      %v1222 = vadd.f32 0.0, %v1221
      %1223 = vdwg.mxu0
      %s1224 = scalar_lea.vmem %s6, 56
      %v1225 = vld [vmem:[%s1224] sm:$0xf]
      %v1226 = vld [vmem:[%s1224 + $0x4] sm:$0xf]
      %v1227 = vunpack.c.l.bf16 %v1225
      %v1228 = vunpack.c.l.bf16 %v1226
      %1229 = vrot.lane.b32.xlu0 %v1012, 32
      %v1230 = vpop.permute.xlu0 %1229
      %1231 = vrot.lane.b32.xlu0 %v1015, 32
      %v1232 = vpop.permute.xlu0 %1231
      %v1234 = vsel %vm480, %v1230, 0
      %v1237 = vsel %vm480, %v1232, 0
      %1239 = vmatpush.bf16.xpose.msra.mxu0 0
      %1240 = vmatpush.bf16.xpose.msra.mxu0 0
      %1241 = vmatpush.bf16.xpose.msra.mxu0 0
      %1242 = vmatpush.bf16.xpose.msra.mxu0 0
      %1243 = vmatpush.bf16.xpose.msra.mxu0 0
      %1244 = vmatpush.bf16.xpose.msra.mxu0 0
      %1245 = vmatpush.bf16.xpose.msra.mxu0 0
      %1246 = vmatpush.bf16.xpose.msra.mxu0 %v1237
      %1247 = vmatmul.bf16.gmra.mxu0 %v1234
      %v1248 = vpop.f32.mrf.mxu0
      %v1249 = vadd.f32 %v1227, %v1248
      %v1250 = vpop.f32.mrf.mxu0
      %v1251 = vadd.f32 %v1228, %v1250
      %1252 = vdwg.mxu0
      %v1253 = vsel %vm742, %v1249, -inf
      %1254 = vmax.xlane.f32.xlu0 %v1253
      %v1255 = vpop.xlane.xlu0 %1254
      %v1256 = vsel %vm742, %v1251, -inf
      %1257 = vmax.xlane.f32.xlu0 %v1256
      %v1258 = vpop.xlane.xlu0 %1257
      %v1259 = vsub.f32 %v1249, %v1255
      %v1260 = vsub.f32 %v1251, %v1258
      %v1261 = vmul.f32 %v1259, 1.442695
      %v1262 = vpow.pop %v1261
      %v1263 = vmul.f32 %v1260, 1.442695
      %v1264 = vpow.pop %v1263
      %v1265 = vsel %vm742, %v1262, 0.0
      %1266 = vadd.xlane.f32.xlu0 %v1265
      %v1267 = vpop.xlane.xlu0 %1266
      %v1268 = vsel %vm742, %v1264, 0.0
      %1269 = vadd.xlane.f32.xlu0 %v1268
      %v1270 = vpop.xlane.xlu0 %1269
      %v1271 = vrcp.pop %v1267
      %v1272 = vrcp.pop %v1270
      %v1273 = vmul.f32 %v1262, %v1271
      %v1274 = vmul.f32 %v1264, %v1272
      %v1275 = vpack.c.bf16 %v1274, %v1273
      %1276 = vrot.lane.b32.xlu0 %v1061, 32
      %v1277 = vpop.permute.xlu0 %1276
      %v1280 = vsel %vm742, %v1275, 0
      %1282 = vmatpush.bf16.msra.mxu0 0
      %1283 = vmatpush.bf16.msra.mxu0 0
      %1284 = vmatpush.bf16.msra.mxu0 0
      %1285 = vmatpush.bf16.msra.mxu0 0
      %1286 = vmatpush.bf16.msra.mxu0 0
      %1287 = vmatpush.bf16.msra.mxu0 0
      %1288 = vmatpush.bf16.msra.mxu0 0
      %1289 = vmatpush.bf16.msra.mxu0 %v1277
      %1290 = vmatmul.bf16.gmra.mxu0 %v1280
      %v1291 = vpop.f32.mrf.mxu0
      %v1292 = vadd.f32 0.0, %v1291
      %v1293 = vpop.f32.mrf.mxu0
      %v1294 = vadd.f32 0.0, %v1293
      %1295 = vdwg.mxu0
      %1298 = vrot.lane.b32.xlu0 %v857, 32
      %v1299 = vpop.permute.xlu0 %1298
      %1300 = vrot.lane.b32.xlu0 %v859, 32
      %v1301 = vpop.permute.xlu0 %1300
      %1306 = vrot.lane.b32.xlu0 %v929, 64
      %v1307 = vpop.permute.xlu0 %1306
      %1308 = vrot.lane.b32.xlu0 %v931, 64
      %v1309 = vpop.permute.xlu0 %1308
      %1314 = vrot.lane.b32.xlu0 %v1001, 96
      %v1315 = vpop.permute.xlu0 %1314
      %1316 = vrot.lane.b32.xlu0 %v1003, 96
      %v1317 = vpop.permute.xlu0 %1316
      %1322 = vrot.lane.b32.xlu0 %v1148, 32
      %v1323 = vpop.permute.xlu0 %1322
      %1324 = vrot.lane.b32.xlu0 %v1150, 32
      %v1325 = vpop.permute.xlu0 %1324
      %1330 = vrot.lane.b32.xlu0 %v1220, 64
      %v1331 = vpop.permute.xlu0 %1330
      %1332 = vrot.lane.b32.xlu0 %v1222, 64
      %v1333 = vpop.permute.xlu0 %1332
      %1338 = vrot.lane.b32.xlu0 %v1292, 96
      %v1339 = vpop.permute.xlu0 %1338
      %1340 = vrot.lane.b32.xlu0 %v1294, 96
      %v1341 = vpop.permute.xlu0 %1340
      %v1344 = vsel %vm480, %v785, %v1299
      %v1345 = vsel %vm480, %v787, %v1301
      %vm1346 = vcmask 523264
      %v1347 = vsel %vm1346, %v1344, %v1307
      %v1348 = vsel %vm1346, %v1345, %v1309
      %vm1349 = vcmask 785408
      %v1350 = vsel %vm1349, %v1347, %v1315
      %v1351 = vsel %vm1349, %v1348, %v1317
      %v1352 = vsel %vm480, %v1076, %v1323
      %v1353 = vsel %vm480, %v1078, %v1325
      %v1354 = vsel %vm1346, %v1352, %v1331
      %v1355 = vsel %vm1346, %v1353, %v1333
      %v1356 = vsel %vm1349, %v1354, %v1339
      %v1357 = vsel %vm1349, %v1355, %v1341
      %v1358 = vpack.c.bf16 %v1351, %v1350
      %v1359 = vpack.c.bf16 %v1357, %v1356
      %v1360 = vld [vmem:[%s4] sm:$0xf]
      %v1361 = vld [vmem:[%s4 + $0x4] sm:$0xf]
      %v1362 = vld [vmem:[%s4 + $0x8] sm:$0xf]
      %v1363 = vld [vmem:[%s4 + $0xc] sm:$0xf]
      %v1364 = vld [vmem:[%s4 + $0x10] sm:$0xf]
      %v1365 = vld [vmem:[%s4 + $0x14] sm:$0xf]
      %v1366 = vld [vmem:[%s4 + $0x18] sm:$0xf]
      %v1367 = vld [vmem:[%s4 + $0x1c] sm:$0xf]
      %v1368 = vld [vmem:[%s4 + $0x20] sm:$0xf]
      %v1369 = vld [vmem:[%s4 + $0x24] sm:$0xf]
      %v1370 = vld [vmem:[%s4 + $0x28] sm:$0xf]
      %v1371 = vld [vmem:[%s4 + $0x2c] sm:$0xf]
      %v1372 = vld [vmem:[%s4 + $0x30] sm:$0xf]
      %v1373 = vld [vmem:[%s4 + $0x34] sm:$0xf]
      %v1374 = vld [vmem:[%s4 + $0x38] sm:$0xf]
      %v1375 = vld [vmem:[%s4 + $0x3c] sm:$0xf]
      %v1376 = vld [vmem:[%s4 + $0x40] sm:$0xf]
      %v1377 = vld [vmem:[%s4 + $0x44] sm:$0xf]
      %v1378 = vld [vmem:[%s4 + $0x48] sm:$0xf]
      %v1379 = vld [vmem:[%s4 + $0x4c] sm:$0xf]
      %v1380 = vld [vmem:[%s4 + $0x50] sm:$0xf]
      %v1381 = vld [vmem:[%s4 + $0x54] sm:$0xf]
      %v1382 = vld [vmem:[%s4 + $0x58] sm:$0xf]
      %v1383 = vld [vmem:[%s4 + $0x5c] sm:$0xf]
      %v1384 = vld [vmem:[%s4 + $0x60] sm:$0xf]
      %v1385 = vld [vmem:[%s4 + $0x64] sm:$0xf]
      %v1386 = vld [vmem:[%s4 + $0x68] sm:$0xf]
      %v1387 = vld [vmem:[%s4 + $0x6c] sm:$0xf]
      %v1388 = vld [vmem:[%s4 + $0x70] sm:$0xf]
      %v1389 = vld [vmem:[%s4 + $0x74] sm:$0xf]
      %v1390 = vld [vmem:[%s4 + $0x78] sm:$0xf]
      %v1391 = vld [vmem:[%s4 + $0x7c] sm:$0xf]
      %v1424 = vunpack.c.l.b16 %v1360
      %v1425 = vunpack.c.l.b16 %v1361
      %v1426 = vunpack.c.l.b16 %v1362
      %v1427 = vunpack.c.l.b16 %v1363
      %v1428 = vunpack.c.l.b16 %v1364
      %v1429 = vunpack.c.l.b16 %v1365
      %v1430 = vunpack.c.l.b16 %v1366
      %v1431 = vunpack.c.l.b16 %v1367
      %v1432 = vunpack.c.l.b16 %v1368
      %v1433 = vunpack.c.l.b16 %v1369
      %v1434 = vunpack.c.l.b16 %v1370
      %v1435 = vunpack.c.l.b16 %v1371
      %v1436 = vunpack.c.l.b16 %v1372
      %v1437 = vunpack.c.l.b16 %v1373
      %v1438 = vunpack.c.l.b16 %v1374
      %v1439 = vunpack.c.l.b16 %v1375
      %v1440 = vunpack.c.l.b16 %v1376
      %v1441 = vunpack.c.l.b16 %v1377
      %v1442 = vunpack.c.l.b16 %v1378
      %v1443 = vunpack.c.l.b16 %v1379
      %v1444 = vunpack.c.l.b16 %v1380
      %v1445 = vunpack.c.l.b16 %v1381
      %v1446 = vunpack.c.l.b16 %v1382
      %v1447 = vunpack.c.l.b16 %v1383
      %v1448 = vunpack.c.l.b16 %v1384
      %v1449 = vunpack.c.l.b16 %v1385
      %v1450 = vunpack.c.l.b16 %v1386
      %v1451 = vunpack.c.l.b16 %v1387
      %v1452 = vunpack.c.l.b16 %v1388
      %v1453 = vunpack.c.l.b16 %v1389
      %v1454 = vunpack.c.l.b16 %v1390
      %v1455 = vunpack.c.l.b16 %v1391
      %v1456 = vpack.c.b16 %v1425, %v1424
      %v1457 = vpack.c.b16 %v1427, %v1426
      %v1458 = vpack.c.b16 %v1429, %v1428
      %v1459 = vpack.c.b16 %v1431, %v1430
      %v1460 = vpack.c.b16 %v1433, %v1432
      %v1461 = vpack.c.b16 %v1435, %v1434
      %v1462 = vpack.c.b16 %v1437, %v1436
      %v1463 = vpack.c.b16 %v1439, %v1438
      %v1464 = vpack.c.b16 %v1441, %v1440
      %v1465 = vpack.c.b16 %v1443, %v1442
      %v1466 = vpack.c.b16 %v1445, %v1444
      %v1467 = vpack.c.b16 %v1447, %v1446
      %v1468 = vpack.c.b16 %v1449, %v1448
      %v1469 = vpack.c.b16 %v1451, %v1450
      %v1470 = vpack.c.b16 %v1453, %v1452
      %v1471 = vpack.c.b16 %v1455, %v1454
      %1488 = vmatpush.bf16.msra.mxu0 %v1463
      %1489 = vmatpush.bf16.msra.mxu0 %v1462
      %1490 = vmatpush.bf16.msra.mxu0 %v1461
      %1491 = vmatpush.bf16.msra.mxu0 %v1460
      %1492 = vmatpush.bf16.msra.mxu0 %v1459
      %1493 = vmatpush.bf16.msra.mxu0 %v1458
      %1494 = vmatpush.bf16.msra.mxu0 %v1457
      %1495 = vmatpush.bf16.msra.mxu0 %v1456
      %1496 = vmatmul.bf16.gmra.mxu0 %v1358
      %v1497 = vpop.f32.mrf.mxu0
      %v1498 = vadd.f32 0.0, %v1497
      %v1499 = vpop.f32.mrf.mxu0
      %v1500 = vadd.f32 0.0, %v1499
      %1501 = vdwg.mxu0
      %1502 = vmatpush.bf16.msra.mxu0 %v1471
      %1503 = vmatpush.bf16.msra.mxu0 %v1470
      %1504 = vmatpush.bf16.msra.mxu0 %v1469
      %1505 = vmatpush.bf16.msra.mxu0 %v1468
      %1506 = vmatpush.bf16.msra.mxu0 %v1467
      %1507 = vmatpush.bf16.msra.mxu0 %v1466
      %1508 = vmatpush.bf16.msra.mxu0 %v1465
      %1509 = vmatpush.bf16.msra.mxu0 %v1464
      %1510 = vmatmul.bf16.gmra.mxu0 %v1359
      %v1511 = vpop.f32.mrf.mxu0
      %v1512 = vadd.f32 %v1498, %v1511
      %v1513 = vpop.f32.mrf.mxu0
      %v1514 = vadd.f32 %v1500, %v1513
      %1515 = vdwg.mxu0
      %v1516 = vadd.f32 %v462, %v1512
      %v1517 = vadd.f32 %v463, %v1514
      %v1518 = vld [vmem:[%s5] sm:$0x1]
      %v1520 = vperm.slane %v1518, 0
      %v1522 = vadd.f32 %v1516, %v1520
      %v1523 = vadd.f32 %v1517, %v1520
      %v1524 = vld [vmem:[%s7] sm:$0x1]
      %v1525 = vld [vmem:[%s8] sm:$0x1]
      %v1526 = vsel %vm480, %v1522, 0.0
      %1527 = vadd.xlane.f32.xlu0 %v1526
      %v1528 = vpop.xlane.xlu0 %1527
      %v1529 = vsel %vm480, %v1523, 0.0
      %1530 = vadd.xlane.f32.xlu0 %v1529
      %v1531 = vpop.xlane.xlu0 %1530
      %v1532 = vmul.f32 %v1528, %v493
      %v1533 = vmul.f32 %v1531, %v493
      %v1534 = vsub.f32 %v1522, %v1532
      %v1535 = vsub.f32 %v1523, %v1533
      %v1536 = vmul.f32 %v1534, %v1534
      %v1537 = vmul.f32 %v1535, %v1535
      %v1538 = vsel %vm480, %v1536, 0.0
      %1539 = vadd.xlane.f32.xlu0 %v1538
      %v1540 = vpop.xlane.xlu0 %1539
      %v1541 = vsel %vm480, %v1537, 0.0
      %1542 = vadd.xlane.f32.xlu0 %v1541
      %v1543 = vpop.xlane.xlu0 %1542
      %v1544 = vmul.f32 %v1540, %v493
      %v1545 = vmul.f32 %v1543, %v493
      %v1546 = vadd.f32 %v1544, 1e-05
      %v1547 = vadd.f32 %v1545, 1e-05
      %v1548 = vrsqrt.pop %v1546
      %v1549 = vmul.f32 %v1548, %v1546
      %v1550 = vmul.f32 %v1549, %v1548
      %v1551 = vmul.f32 0.5, %v1550
      %v1552 = vsub.f32 1.5, %v1551
      %v1553 = vmul.f32 %v1548, %v1552
      %vm1554 = vweird.f32 %v1546
      %vm1555 = vweird.f32 %v1548
      %vm1556 = vmor %vm1554, %vm1555
      %v1557 = vsel %vm1556, %v1548, %v1553
      %v1558 = vrsqrt.pop %v1547
      %v1559 = vmul.f32 %v1558, %v1547
      %v1560 = vmul.f32 %v1559, %v1558
      %v1561 = vmul.f32 0.5, %v1560
      %v1562 = vsub.f32 1.5, %v1561
      %v1563 = vmul.f32 %v1558, %v1562
      %vm1564 = vweird.f32 %v1547
      %vm1565 = vweird.f32 %v1558
      %vm1566 = vmor %vm1564, %vm1565
      %v1567 = vsel %vm1566, %v1558, %v1563
      %v1568 = vmul.f32 %v1534, %v1557
      %v1569 = vmul.f32 %v1535, %v1567
      %v1571 = vperm.slane %v1524, 0
      %v1573 = vmul.f32 %v1568, %v1571
      %v1574 = vmul.f32 %v1569, %v1571
      %v1576 = vperm.slane %v1525, 0
      %v1578 = vadd.f32 %v1573, %v1576
      %v1579 = vadd.f32 %v1574, %v1576
      %v1580 = vpack.c.bf16 %v1579, %v1578
      %v1581 = vld [vmem:[%s9] sm:$0xf]
      %v1582 = vld [vmem:[%s9 + $0x4] sm:$0xf]
      %v1583 = vld [vmem:[%s9 + $0x8] sm:$0xf]
      %v1584 = vld [vmem:[%s9 + $0xc] sm:$0xf]
      %v1585 = vld [vmem:[%s10] sm:$0x1]
      %v1587 = vperm.slane %v1585, 0
      %v1593 = vunpack.c.l.b16 %v1581
      %v1594 = vunpack.c.l.b16 %v1582
      %v1595 = vunpack.c.l.b16 %v1583
      %v1596 = vunpack.c.l.b16 %v1584
      %v1597 = vpack.c.b16 %v1594, %v1593
      %v1598 = vpack.c.b16 %v1596, %v1595
      %v1602 = vsel %vm480, %v1580, 0
      %1604 = vmatpush.bf16.msra.mxu0 0
      %1605 = vmatpush.bf16.msra.mxu0 0
      %1606 = vmatpush.bf16.msra.mxu0 0
      %1607 = vmatpush.bf16.msra.mxu0 0
      %1608 = vmatpush.bf16.msra.mxu0 0
      %1609 = vmatpush.bf16.msra.mxu0 0
      %1610 = vmatpush.bf16.msra.mxu0 %v1598
      %1611 = vmatpush.bf16.msra.mxu0 %v1597
      %1612 = vmatmul.bf16.gmra.mxu0 %v1602
      %v1613 = vpop.f32.mrf.mxu0
      %v1614 = vadd.f32 %v1587, %v1613
      %v1615 = vpop.f32.mrf.mxu0
      %v1616 = vadd.f32 %v1587, %v1615
      %1617 = vdwg.mxu0
      %v1618 = vmul.f32 %v1614, 0.5
      %v1619 = vmul.f32 %v1616, 0.5
      %v1620 = vmul.f32 %v1614, 0.70710677
      %v1621 = vmul.f32 %v1616, 0.70710677
      %v1622 = vmul.f32 %v1620, %v1620
      %v1623 = vmin.f32 16.0, %v1622
      %v1624 = vmul.f32 %v1623, 2.1237322e-06
      %v1625 = vadd.f32 %v1624, 0.00028619796
      %v1626 = vmul.f32 %v1623, %v1625
      %v1627 = vadd.f32 %v1626, 0.0036580483
      %v1628 = vmul.f32 %v1623, %v1627
      %v1629 = vadd.f32 %v1628, 0.05243302
      %v1630 = vmul.f32 %v1623, %v1629
      %v1631 = vadd.f32 %v1630, 0.18741608
      %v1632 = vmul.f32 %v1623, %v1631
      %v1633 = vadd.f32 %v1632, 1.1283791
      %v1634 = vmul.f32 %v1620, %v1633
      %v1635 = vmul.f32 %v1623, 3.8918573e-05
      %v1636 = vadd.f32 %v1635, 0.001143296
      %v1637 = vmul.f32 %v1623, %v1636
      %v1638 = vadd.f32 %v1637, 0.014752088
      %v1639 = vmul.f32 %v1623, %v1638
      %v1640 = vadd.f32 %v1639, 0.112945676
      %v1641 = vmul.f32 %v1623, %v1640
      %v1642 = vadd.f32 %v1641, 0.4994258
      %v1643 = vmul.f32 %v1623, %v1642
      %v1644 = vadd.f32 %v1643, 1.0
      %v1645 = vrcp.pop %v1644
      %v1646 = vmul.f32 %v1644, %v1645
      %v1647 = vsub.f32 1.0, %v1646
      %v1648 = vmul.f32 %v1645, %v1647
      %v1649 = vadd.f32 %v1645, %v1648
      %vm1650 = vweird.f32 %v1644
      %vm1651 = vweird.f32 %v1645
      %vm1652 = vmor %vm1650, %vm1651
      %v1653 = vsel %vm1652, %v1645, %v1649
      %v1654 = vand.u32 2147483647, %v1644
      %vm1655 = vcmp.eq.f32.partialorder %v1654, 8.507059e+37
      %v1656 = vand.u32 %v1644, 2147483648
      %v1657 = vor.u32 1.1754944e-38, %v1656
      %v1658 = vsel %vm1655, %v1657, %v1653
      %v1659 = vmul.f32 %v1634, %v1658
      %v1660 = vmin.f32 %v1659, 1.0
      %v1661 = vmax.f32 %v1660, -1.0
      %v1662 = vmul.f32 %v1621, %v1621
      %v1663 = vmin.f32 16.0, %v1662
      %v1664 = vmul.f32 %v1663, 2.1237322e-06
      %v1665 = vadd.f32 %v1664, 0.00028619796
      %v1666 = vmul.f32 %v1663, %v1665
      %v1667 = vadd.f32 %v1666, 0.0036580483
      %v1668 = vmul.f32 %v1663, %v1667
      %v1669 = vadd.f32 %v1668, 0.05243302
      %v1670 = vmul.f32 %v1663, %v1669
      %v1671 = vadd.f32 %v1670, 0.18741608
      %v1672 = vmul.f32 %v1663, %v1671
      %v1673 = vadd.f32 %v1672, 1.1283791
      %v1674 = vmul.f32 %v1621, %v1673
      %v1675 = vmul.f32 %v1663, 3.8918573e-05
      %v1676 = vadd.f32 %v1675, 0.001143296
      %v1677 = vmul.f32 %v1663, %v1676
      %v1678 = vadd.f32 %v1677, 0.014752088
      %v1679 = vmul.f32 %v1663, %v1678
      %v1680 = vadd.f32 %v1679, 0.112945676
      %v1681 = vmul.f32 %v1663, %v1680
      %v1682 = vadd.f32 %v1681, 0.4994258
      %v1683 = vmul.f32 %v1663, %v1682
      %v1684 = vadd.f32 %v1683, 1.0
      %v1685 = vrcp.pop %v1684
      %v1686 = vmul.f32 %v1684, %v1685
      %v1687 = vsub.f32 1.0, %v1686
      %v1688 = vmul.f32 %v1685, %v1687
      %v1689 = vadd.f32 %v1685, %v1688
      %vm1690 = vweird.f32 %v1684
      %vm1691 = vweird.f32 %v1685
      %vm1692 = vmor %vm1690, %vm1691
      %v1693 = vsel %vm1692, %v1685, %v1689
      %v1694 = vand.u32 2147483647, %v1684
      %vm1695 = vcmp.eq.f32.partialorder %v1694, 8.507059e+37
      %v1696 = vand.u32 %v1684, 2147483648
      %v1697 = vor.u32 1.1754944e-38, %v1696
      %v1698 = vsel %vm1695, %v1697, %v1693
      %v1699 = vmul.f32 %v1674, %v1698
      %v1700 = vmin.f32 %v1699, 1.0
      %v1701 = vmax.f32 %v1700, -1.0
      %v1702 = vadd.f32 %v1661, 1.0
      %v1703 = vadd.f32 %v1701, 1.0
      %v1704 = vmul.f32 %v1618, %v1702
      %v1705 = vmul.f32 %v1619, %v1703
      %v1706 = vpack.c.bf16 %v1705, %v1704
      %v1707 = vld [vmem:[%s11] sm:$0xf]
      %v1708 = vld [vmem:[%s11 + $0x4] sm:$0xf]
      %v1709 = vld [vmem:[%s11 + $0x8] sm:$0xf]
      %v1710 = vld [vmem:[%s11 + $0xc] sm:$0xf]
      %v1711 = vld [vmem:[%s11 + $0x10] sm:$0xf]
      %v1712 = vld [vmem:[%s11 + $0x14] sm:$0xf]
      %v1713 = vld [vmem:[%s11 + $0x18] sm:$0xf]
      %v1714 = vld [vmem:[%s11 + $0x1c] sm:$0xf]
      %v1715 = vld [vmem:[%s11 + $0x20] sm:$0xf]
      %v1716 = vld [vmem:[%s11 + $0x24] sm:$0xf]
      %v1717 = vld [vmem:[%s11 + $0x28] sm:$0xf]
      %v1718 = vld [vmem:[%s11 + $0x2c] sm:$0xf]
      %v1719 = vld [vmem:[%s11 + $0x30] sm:$0xf]
      %v1720 = vld [vmem:[%s11 + $0x34] sm:$0xf]
      %v1721 = vld [vmem:[%s11 + $0x38] sm:$0xf]
      %v1722 = vld [vmem:[%s11 + $0x3c] sm:$0xf]
      %v1723 = vld [vmem:[%s12] sm:$0x1]
      %v1725 = vperm.slane %v1723, 0
      %v1743 = vunpack.c.l.b16 %v1707
      %v1744 = vunpack.c.l.b16 %v1708
      %v1745 = vunpack.c.l.b16 %v1709
      %v1746 = vunpack.c.l.b16 %v1710
      %v1747 = vunpack.c.l.b16 %v1711
      %v1748 = vunpack.c.l.b16 %v1712
      %v1749 = vunpack.c.l.b16 %v1713
      %v1750 = vunpack.c.l.b16 %v1714
      %v1751 = vunpack.c.l.b16 %v1715
      %v1752 = vunpack.c.l.b16 %v1716
      %v1753 = vunpack.c.l.b16 %v1717
      %v1754 = vunpack.c.l.b16 %v1718
      %v1755 = vunpack.c.l.b16 %v1719
      %v1756 = vunpack.c.l.b16 %v1720
      %v1757 = vunpack.c.l.b16 %v1721
      %v1758 = vunpack.c.l.b16 %v1722
      %v1759 = vpack.c.b16 %v1744, %v1743
      %v1760 = vpack.c.b16 %v1746, %v1745
      %v1761 = vpack.c.b16 %v1748, %v1747
      %v1762 = vpack.c.b16 %v1750, %v1749
      %v1763 = vpack.c.b16 %v1752, %v1751
      %v1764 = vpack.c.b16 %v1754, %v1753
      %v1765 = vpack.c.b16 %v1756, %v1755
      %v1766 = vpack.c.b16 %v1758, %v1757
      %1775 = vmatpush.bf16.msra.mxu0 %v1766
      %1776 = vmatpush.bf16.msra.mxu0 %v1765
      %1777 = vmatpush.bf16.msra.mxu0 %v1764
      %1778 = vmatpush.bf16.msra.mxu0 %v1763
      %1779 = vmatpush.bf16.msra.mxu0 %v1762
      %1780 = vmatpush.bf16.msra.mxu0 %v1761
      %1781 = vmatpush.bf16.msra.mxu0 %v1760
      %1782 = vmatpush.bf16.msra.mxu0 %v1759
      %1783 = vmatmul.bf16.gmra.mxu0 %v1706
      %v1784 = vpop.f32.mrf.mxu0
      %v1785 = vadd.f32 %v1725, %v1784
      %v1786 = vpop.f32.mrf.mxu0
      %v1787 = vadd.f32 %v1725, %v1786
      %1788 = vdwg.mxu0
      %v1789 = vadd.f32 %v1522, %v1785
      %v1790 = vadd.f32 %v1523, %v1787
      %1791 = vxpose.xlu0.b32.start [1/16] %v1789, 128
      %1792 = vxpose.xlu0.b32.cont [2/16] %v1790, 128
      %1793 = vxpose.xlu0.b32.cont [3/16] 0.0, 128
      %1794 = vxpose.xlu0.b32.cont [4/16] 0.0, 128
      %1795 = vxpose.xlu0.b32.cont [5/16] 0.0, 128
      %1796 = vxpose.xlu0.b32.cont [6/16] 0.0, 128
      %1797 = vxpose.xlu0.b32.cont [7/16] 0.0, 128
      %1798 = vxpose.xlu0.b32.cont [8/16] 0.0, 128
      %1799 = vxpose.xlu0.b32.cont [9/16] 0.0, 128
      %1800 = vxpose.xlu0.b32.cont [10/16] 0.0, 128
      %1801 = vxpose.xlu0.b32.cont [11/16] 0.0, 128
      %1802 = vxpose.xlu0.b32.cont [12/16] 0.0, 128
      %1803 = vxpose.xlu0.b32.cont [13/16] 0.0, 128
      %1804 = vxpose.xlu0.b32.cont [14/16] 0.0, 128
      %1805 = vxpose.xlu0.b32.cont [15/16] 0.0, 128
      %1806 = vxpose.xlu0.b32.end [16/16] 0.0, 128
      %v1807 = vpop.trf.xlu0
      %v1808 = vpop.trf.xlu0
      %v1809 = vpop.trf.xlu0
      %v1810 = vpop.trf.xlu0
      %v1811 = vpop.trf.xlu0
      %v1812 = vpop.trf.xlu0
      %v1813 = vpop.trf.xlu0
      %v1814 = vpop.trf.xlu0
      %v1815 = vpop.trf.xlu0
      %v1816 = vpop.trf.xlu0
      %v1817 = vpop.trf.xlu0
      %v1818 = vpop.trf.xlu0
      %v1819 = vpop.trf.xlu0
      %v1820 = vpop.trf.xlu0
      %v1821 = vpop.trf.xlu0
      %v1822 = vpop.trf.xlu0
      %1823 = vst.msk [vmem:[%s440] sm:$0xff] %vm742, %v1807
      %1824 = vst.msk [vmem:[%s440 + $0x8] sm:$0xff] %vm742, %v1808
      %1825 = vst.msk [vmem:[%s440 + $0x10] sm:$0xff] %vm742, %v1809
      %1826 = vst.msk [vmem:[%s440 + $0x18] sm:$0xff] %vm742, %v1810
      %p1827 = scmp.lt.s32.totalorder %s24, 1
      %s1828 = scalar_select %p1827, %s24, 1
      %s1829 = smul.addr %s1828, 4
      %s1830 = smul.addr %s1829, 8
      %s1831 = scalar_lea.vmem %s13, %s1830
      // Predicated region
      $region73: #{transformer_forward.1} parent=71 // pred_check
        %p1832 = pneg %p320
      $region74: #{transformer_forward.1} parent=71 // pred_check_branch
        %1834 = sbr.rel (%p1832) target = $region76
      $region75: #{transformer_forward.1} parent=71 // pred_region
        _
      $region76: #{transformer_forward.1} parent=71 // pred_fallthru
        _
    $region72: #{transformer_forward.1} parent=5 // pred_fallthru
      _
    %p1835 = scmp.le.s32.totalorder 2, %s19
    // Predicated region
    $region77: #{transformer_forward.1} parent=5 // pred_check
      %p1836 = pneg %p1835
    $region78: #{transformer_forward.1} parent=5 // pred_check_branch
      %1838 = sbr.rel (%p1836) target = $region80
    $region79: #{transformer_forward.1} parent=5 // pred_region
      %s1839 = ssub.s32 %s19, 2
      // Predicated region
      $region81: #{transformer_forward.1} parent=79 // pred_check
        %p1840 = pneg %p326
      $region82: #{transformer_forward.1} parent=79 // pred_check_branch
        %1842 = sbr.rel (%p1840) target = $region84
      $region83: #{transformer_forward.1} parent=79 // pred_region
        %p1843 = scmp.lt.s32.totalorder %s25, 1
        %s1844 = scalar_select %p1843, %s25, 1
        %s1845 = smul.addr %s1844, 4
        %s1846 = smul.addr %s1845, 8
        %s1847 = scalar_lea.vmem %s13, %s1846
      $region84: #{transformer_forward.1} parent=79 // pred_fallthru
        _
    $region80: #{transformer_forward.1} parent=5 // pred_fallthru
      _
  $region6: #{transformer_forward.1} parent=0 // loop_footer
    %s23 = sadd.s32 1, %s19
  $region7: #{transformer_forward.1} parent=0 // loop_footer_branch
    %18 = sbr.rel target = $region3
  $region8: #{transformer_forward.1} parent=0 // loop_exit
    _

</llo_original>
